<compile_context>
chip_gen: v6e
topology: v6e:2x2x1
jax: 0.10.0
libtpu: 0.0.40
codegen_flags: <defaults>
</compile_context>

<pallas_src>
import functools

import jax
import jax.numpy as jnp
from jax import lax
from jax.experimental import pallas as pl
from jax.experimental.pallas import tpu as pltpu


def _lstm_chunk_kernel(maxlen_ref, lens_ref, x_ref, h0_ref, c0_ref,
                       wih_ref, whh_ref, bias_ref,
                       y_ref, hn_ref, cn_ref,
                       h_sc, c_sc, xp_sc):
    """One grid step == one (batch-group, time-chunk) tile of the recurrence.

    Grid: (n_groups ["parallel"], n_chunks ["arbitrary"]).

    maxlen_ref : (1,)            int32 SMEM  max valid length (scalar prefetch)
    lens_ref   : (8, 1)          int32 VMEM  per-row valid lengths of this group
    x_ref      : (Tc*8, E)       cdt   VMEM  raw inputs of this chunk, row-major
                                             in (t, b-within-group) order
    h0_ref     : (8, H)          f32         initial hidden state (this group)
    c0_ref     : (8, H)          f32         initial cell state
    wih_ref    : (E, 4H)         cdt         input->gates weights (ifgo)
    whh_ref    : (H, 4H)         cdt         hidden->gates weights (ifgo)
    bias_ref   : (1, 4H)         f32         b_ih + b_hh
    y_ref      : (Tc, 8, H)      f32         per-timestep outputs (0 where padded)
    hn_ref     : (8, H)          f32         state at last valid step
    cn_ref     : (8, H)          f32
    h_sc/c_sc  : (8, H)          f32   VMEM  recurrent carry across chunks
    xp_sc      : (Tc*8, 4H)      f32   VMEM  fused per-chunk input projection
    """
    chunk = pl.program_id(1)
    n_chunks = pl.num_programs(1)
    tc = y_ref.shape[0]
    hdim = h_sc.shape[1]
    t0 = chunk * tc

    @pl.when(chunk == 0)
    def _init():
        h_sc[...] = h0_ref[...]
        c_sc[...] = c0_ref[...]

    @pl.when(t0 < maxlen_ref[0])
    def _compute():
        # Fused, non-recurrent input projection for the whole chunk: one
        # (Tc*8, E) @ (E, 4H) MXU matmul, off the serial per-step chain.
        xp_sc[...] = (
            jnp.dot(x_ref[...], wih_ref[...],
                    preferred_element_type=jnp.float32)
            + bias_ref[...]
        )

        lens = lens_ref[...]     # (8, 1) int32, hoisted out of the loop
        whh = whh_ref[...]       # (H, 4H), hoisted out of the loop

        def step(i, carry):
            h_prev, c_prev = carry
            row0 = pl.multiple_of(i * 8, 8)
            # Only the recurrent matmul lives on the serial chain.
            # (Further micro-opt: keep W_hh weight-stationary via
            #  pltpu.matmul_push_rhs / matmul_acc_lhs / matmul_pop.)
            gates = xp_sc[pl.ds(row0, 8), :] + jnp.dot(
                h_prev.astype(whh.dtype), whh,
                preferred_element_type=jnp.float32)            # (8, 4H)

            # Full-slab activations: 1 sigmoid + 1 tanh over the whole
            # (8, 4H) slab instead of four (8, H) EUP passes.
            sig = jax.nn.sigmoid(gates)
            tnh = jnp.tanh(gates)
            i_g = sig[:, 0 * hdim:1 * hdim]
            f_g = sig[:, 1 * hdim:2 * hdim]
            g_g = tnh[:, 2 * hdim:3 * hdim]
            o_g = sig[:, 3 * hdim:4 * hdim]

            c_new = f_g * c_prev + i_g * g_g
            h_new = o_g * jnp.tanh(c_new)

            valid = (t0 + i) < lens                             # (8, 1) bool
            y_ref[i] = jnp.where(valid, h_new, 0.0)
            return (jnp.where(valid, h_new, h_prev),
                    jnp.where(valid, c_new, c_prev))

        h_fin, c_fin = lax.fori_loop(0, tc, step, (h_sc[...], c_sc[...]),
                                     unroll=min(8, tc))
        h_sc[...] = h_fin
        c_sc[...] = c_fin

    @pl.when(t0 >= maxlen_ref[0])
    def _skipped():
        # Chunk lies entirely beyond every sequence: keep the padded output
        # well defined (zeros) instead of leaving stale HBM contents.
        y_ref[...] = jnp.zeros_like(y_ref)

    @pl.when(chunk == n_chunks - 1)
    def _finalize():
        hn_ref[...] = h_sc[...]
        cn_ref[...] = c_sc[...]


@functools.partial(jax.jit, static_argnames=("tc", "compute_dtype"))
def _encoder_padded(seq_p, lens_p, h0, c0, wih_t, whh_t, bias, *,
                    tc, compute_dtype):
    """Runs the LSTM on batch-padded (Bp = k*8) / time-padded (T_pad) inputs."""
    bp, t_pad, edim = seq_p.shape
    hdim = whh_t.shape[0]
    n_chunks = t_pad // tc
    n_groups = bp // 8

    # Reorder the input to (group, time, 8-row, E) and flatten rows so each
    # chunk's block is one contiguous (Tc*8, E) slab for a single MXU matmul.
    x_g = seq_p.reshape(n_groups, 8, t_pad, edim).transpose(0, 2, 1, 3)
    x2d = x_g.reshape(n_groups * t_pad * 8, edim).astype(compute_dtype)

    wih_c = wih_t.astype(compute_dtype)
    whh_c = whh_t.astype(compute_dtype)
    bias2 = bias.reshape(1, 4 * hdim).astype(jnp.float32)

    maxlen = jnp.max(lens_p).astype(jnp.int32).reshape(1)      # SMEM scalar
    lens_b1 = lens_p.reshape(bp, 1).astype(jnp.int32)

    y, hn, cn = pl.pallas_call(
        _lstm_chunk_kernel,
        out_shape=(
            jax.ShapeDtypeStruct((n_groups * t_pad, 8, hdim), jnp.float32),
            jax.ShapeDtypeStruct((bp, hdim), jnp.float32),
            jax.ShapeDtypeStruct((bp, hdim), jnp.float32),
        ),
        grid_spec=pltpu.PrefetchScalarGridSpec(
            num_scalar_prefetch=1,                    # maxlen -> SMEM
            grid=(n_groups, n_chunks),
            in_specs=[
                pl.BlockSpec((8, 1), lambda g, c, m: (g, 0)),             # lens
                pl.BlockSpec((tc * 8, edim),
                             lambda g, c, m: (g * n_chunks + c, 0)),      # x
                pl.BlockSpec((8, hdim), lambda g, c, m: (g, 0)),          # h0
                pl.BlockSpec((8, hdim), lambda g, c, m: (g, 0)),          # c0
                pl.BlockSpec((edim, 4 * hdim), lambda g, c, m: (0, 0)),   # W_ih^T
                pl.BlockSpec((hdim, 4 * hdim), lambda g, c, m: (0, 0)),   # W_hh^T
                pl.BlockSpec((1, 4 * hdim), lambda g, c, m: (0, 0)),      # bias
            ],
            out_specs=[
                pl.BlockSpec((tc, 8, hdim),
                             lambda g, c, m: (g * n_chunks + c, 0, 0)),   # y
                pl.BlockSpec((8, hdim), lambda g, c, m: (g, 0)),          # h_n
                pl.BlockSpec((8, hdim), lambda g, c, m: (g, 0)),          # c_n
            ],
            scratch_shapes=[
                pltpu.VMEM((8, hdim), jnp.float32),              # h carry
                pltpu.VMEM((8, hdim), jnp.float32),              # c carry
                pltpu.VMEM((tc * 8, 4 * hdim), jnp.float32),     # chunk gates
            ],
        ),
        compiler_params=pltpu.CompilerParams(
            # batch groups independent -> "parallel" (uses both v7x TCs);
            # time chunks carry the recurrence -> "arbitrary" (sequential).
            dimension_semantics=("parallel", "arbitrary"),
        ),
    )(maxlen, lens_b1, x2d, h0, c0, wih_c, whh_c, bias2)

    # (n_groups*T_pad, 8, H) -> (Bp, T_pad, H)
    y_bth = y.reshape(n_groups, t_pad, 8, hdim).transpose(0, 2, 1, 3)
    y_bth = y_bth.reshape(bp, t_pad, hdim)
    return y_bth, hn, cn


def my_encoder_ver_1_forward(seq, seq_len, params, init_state=None,
                             time_chunk=128, compute_dtype=jnp.float32,
                             crop_to_max_len=True):
    """Pallas equivalent of myEncoder_ver_1.forward.

    seq        : [B, T, E] float  (batch_first, PyTorch convention)
    seq_len    : [B] int          valid lengths
    params     : (W_ih (4H,E), W_hh (4H,H), b_ih (4H,), b_hh (4H,))
    init_state : optional ((1,B,H), (1,B,H)) like PyTorch (h_0, c_0)
    returns    : (seq_hiddens [B, max_len, H], (h_n (1,B,H), c_n (1,B,H)))
    """
    W_ih, W_hh, b_ih, b_hh = params
    B, T, E = seq.shape
    H = W_hh.shape[1]

    # Pad batch to the sublane width (8) and time to a multiple of the chunk.
    Bp = max(8, ((B + 7) // 8) * 8)
    tc = max(1, min(int(time_chunk), T))
    T_pad = ((T + tc - 1) // tc) * tc

    seq_f = jnp.asarray(seq, jnp.float32)
    seq_p = jnp.zeros((Bp, T_pad, E), jnp.float32).at[:B, :T].set(seq_f)

    # NOTE: PyTorch's pack_padded_sequence raises on lengths > T; we clamp
    # instead, which silently diverges for out-of-range lengths.
    lens = jnp.minimum(jnp.asarray(seq_len, jnp.int32).reshape(-1), T)
    lens_p = jnp.zeros((Bp,), jnp.int32).at[:B].set(lens)

    if init_state is None:
        h0 = jnp.zeros((Bp, H), jnp.float32)
        c0 = jnp.zeros((Bp, H), jnp.float32)
    else:
        h0 = jnp.zeros((Bp, H), jnp.float32).at[:B].set(
            jnp.asarray(init_state[0], jnp.float32)[0])
        c0 = jnp.zeros((Bp, H), jnp.float32).at[:B].set(
            jnp.asarray(init_state[1], jnp.float32)[0])

    wih_t = jnp.asarray(W_ih, jnp.float32).T            # (E, 4H)
    whh_t = jnp.asarray(W_hh, jnp.float32).T            # (H, 4H)
    bias = jnp.asarray(b_ih, jnp.float32) + jnp.asarray(b_hh, jnp.float32)

    # Dispatch the kernel first (async) ...
    y_bth, hn, cn = _encoder_padded(seq_p, lens_p, h0, c0, wih_t, whh_t, bias,
                                    tc=tc, compute_dtype=compute_dtype)

    if crop_to_max_len:
        # ... then resolve the tiny max(seq_len) for the pad_packed_sequence
        # crop; the device->host read no longer gates kernel dispatch.  Use
        # crop_to_max_len=False for a fully static (B, T, H) output and no
        # host round trip at all.
        max_len = int(jnp.max(lens)) if B > 0 else 0
        seq_hiddens = y_bth[:B, :max_len]
    else:
        seq_hiddens = y_bth[:B, :T]
    return seq_hiddens, (hn[:B][None, ...], cn[:B][None, ...])


def _reference_forward(seq, seq_len, params):
    """Pure-JAX reference (same packed-sequence semantics) for verification."""
    W_ih, W_hh, b_ih, b_hh = params
    B, T, E = seq.shape
    H = W_hh.shape[1]
    max_len = int(jnp.max(jnp.asarray(seq_len)))
    h = jnp.zeros((B, H), jnp.float32)
    c = jnp.zeros((B, H), jnp.float32)
    ys = []
    for t in range(max_len):
        x_t = seq[:, t, :]
        gates = x_t @ W_ih.T + h @ W_hh.T + b_ih + b_hh
        i_g = jax.nn.sigmoid(gates[:, 0 * H:1 * H])
        f_g = jax.nn.sigmoid(gates[:, 1 * H:2 * H])
        g_g = jnp.tanh(gates[:, 2 * H:3 * H])
        o_g = jnp.tanh(gates[:, 3 * H:4 * H]) * 0 + jax.nn.sigmoid(
            gates[:, 3 * H:4 * H])
        c_new = f_g * c + i_g * g_g
        h_new = o_g * jnp.tanh(c_new)
        valid = (t < jnp.asarray(seq_len)).reshape(B, 1)
        h = jnp.where(valid, h_new, h)
        c = jnp.where(valid, c_new, c)
        ys.append(jnp.where(valid, h_new, 0.0))
    y = jnp.stack(ys, axis=1)
    return y, (h[None], c[None])


if __name__ == "__main__":
    # Small shapes consistent with the module: batch=2, seq=8, embed=16, hidden=32.
    B, T, E, H = 2, 8, 16, 32

    key = jax.random.PRNGKey(0)
    k_seq, k_wih, k_whh, k_bih, k_bhh = jax.random.split(key, 5)

    # PyTorch-style U(-1/sqrt(H), 1/sqrt(H)) parameter init, gate order [i,f,g,o].
    bound = 1.0 / jnp.sqrt(jnp.float32(H))
    W_ih = jax.random.uniform(k_wih, (4 * H, E), jnp.float32, -bound, bound)
    W_hh = jax.random.uniform(k_whh, (4 * H, H), jnp.float32, -bound, bound)
    b_ih = jax.random.uniform(k_bih, (4 * H,), jnp.float32, -bound, bound)
    b_hh = jax.random.uniform(k_bhh, (4 * H,), jnp.float32, -bound, bound)
    params = (W_ih, W_hh, b_ih, b_hh)

    seq = jax.random.normal(k_seq, (B, T, E), jnp.float32)

    # Case 1: two active time chunks (tc=4), cropped output length 6.
    seq_len = jnp.array([6, 4], dtype=jnp.int32)
    seq_hiddens, (h_n, c_n) = my_encoder_ver_1_forward(seq, seq_len, params,
                                                       time_chunk=4)
    jax.block_until_ready((seq_hiddens, h_n, c_n))

    ref_y, (ref_h, ref_c) = _reference_forward(seq, seq_len, params)
    assert seq_hiddens.shape == (B, 6, H)
    assert h_n.shape == (1, B, H) and c_n.shape == (1, B, H)
    assert jnp.allclose(seq_hiddens, ref_y, atol=1e-5, rtol=1e-5)
    assert jnp.allclose(h_n, ref_h, atol=1e-5, rtol=1e-5)
    assert jnp.allclose(c_n, ref_c, atol=1e-5, rtol=1e-5)

    # Case 2: the second time chunk is entirely padded (exercises the
    # pl.when chunk-skip path, the y zero-fill, and final-state writeback
    # from the scratch carry).
    seq_len2 = jnp.array([4, 2], dtype=jnp.int32)
    seq_hiddens2, (h_n2, c_n2) = my_encoder_ver_1_forward(seq, seq_len2, params,
                                                          time_chunk=4)
    jax.block_until_ready((seq_hiddens2, h_n2, c_n2))

    ref_y2, (ref_h2, ref_c2) = _reference_forward(seq, seq_len2, params)
    assert seq_hiddens2.shape == (B, 4, H)
    assert jnp.allclose(seq_hiddens2, ref_y2, atol=1e-5, rtol=1e-5)
    assert jnp.allclose(h_n2, ref_h2, atol=1e-5, rtol=1e-5)
    assert jnp.allclose(c_n2, ref_c2, atol=1e-5, rtol=1e-5)

    # Case 3: default (large) time_chunk -> single chunk covering the whole
    # sequence, and the uncropped static-shape output path (no host sync).
    seq_hiddens3, (h_n3, c_n3) = my_encoder_ver_1_forward(
        seq, seq_len, params, crop_to_max_len=False)
    jax.block_until_ready((seq_hiddens3, h_n3, c_n3))
    assert seq_hiddens3.shape == (B, T, H)
    assert jnp.allclose(seq_hiddens3[:, :6], ref_y, atol=1e-5, rtol=1e-5)
    assert jnp.allclose(seq_hiddens3[:, 6:], 0.0)      # padded tail is zeroed
    assert jnp.allclose(h_n3, ref_h, atol=1e-5, rtol=1e-5)
    assert jnp.allclose(c_n3, ref_c, atol=1e-5, rtol=1e-5)

    print("KERNEL_OK")
</pallas_src>

<mosaic_0001>
module attributes {stable_mosaic.version = 11 : i64} {
  func.func @_lstm_chunk_kernel(%arg0: i32, %arg1: i32, %arg2: memref<1xi32, #tpu.memory_space<smem>>, %arg3: memref<8x1xi32, #tpu.memory_space<vmem>>, %arg4: memref<32x16xf32, #tpu.memory_space<vmem>>, %arg5: memref<8x32xf32, #tpu.memory_space<vmem>>, %arg6: memref<8x32xf32, #tpu.memory_space<vmem>>, %arg7: memref<16x128xf32, #tpu.memory_space<vmem>>, %arg8: memref<32x128xf32, #tpu.memory_space<vmem>>, %arg9: memref<1x128xf32, #tpu.memory_space<vmem>>, %arg10: memref<4x8x32xf32, #tpu.memory_space<vmem>>, %arg11: memref<8x32xf32, #tpu.memory_space<vmem>>, %arg12: memref<8x32xf32, #tpu.memory_space<vmem>>, %arg13: memref<8x32xf32, #tpu.memory_space<vmem>>, %arg14: memref<8x32xf32, #tpu.memory_space<vmem>>, %arg15: memref<32x128xf32, #tpu.memory_space<vmem>>) attributes {dimension_semantics = [#tpu.dimension_semantics<parallel>, #tpu.dimension_semantics<arbitrary>], iteration_bounds = array<i64: 1, 2>, scalar_prefetch = 1 : i64, scratch_operands = 3 : i64, tpu.core_type = #tpu.core_type<tc>, window_params = [{transform_indices = @transform_0, window_bounds = array<i64: 8, 1>}, {transform_indices = @transform_1, window_bounds = array<i64: 32, 16>}, {transform_indices = @transform_2, window_bounds = array<i64: 8, 32>}, {transform_indices = @transform_3, window_bounds = array<i64: 8, 32>}, {pipeline_mode = #tpu.pipeline_mode<synchronous>, transform_indices = @transform_4, window_bounds = array<i64: 16, 128>}, {pipeline_mode = #tpu.pipeline_mode<synchronous>, transform_indices = @transform_5, window_bounds = array<i64: 32, 128>}, {pipeline_mode = #tpu.pipeline_mode<synchronous>, transform_indices = @transform_6, window_bounds = array<i64: 1, 128>}, {transform_indices = @transform_7, window_bounds = array<i64: 4, 8, 32>}, {transform_indices = @transform_8, window_bounds = array<i64: 8, 32>}, {transform_indices = @transform_9, window_bounds = array<i64: 8, 32>}]} {
    %c4_i32 = arith.constant 4 : i32
    %0 = arith.muli %arg1, %c4_i32 : i32
    %c0_i32 = arith.constant 0 : i32
    %1 = arith.cmpi eq, %arg1, %c0_i32 : i32
    %2 = arith.extui %1 : i1 to i32
    %c0_i32_0 = arith.constant 0 : i32
    %3 = arith.cmpi ne, %2, %c0_i32_0 : i32
    scf.if %3 {
      %c0_5 = arith.constant 0 : index
      %c0_6 = arith.constant 0 : index
      %15 = vector.load %arg5[%c0_5, %c0_6] : memref<8x32xf32, #tpu.memory_space<vmem>>, vector<8x32xf32>
      %c0_7 = arith.constant 0 : index
      %c0_8 = arith.constant 0 : index
      %16 = vector.load %arg13[%c0_7, %c0_8] : memref<8x32xf32, #tpu.memory_space<vmem>>, vector<8x32xf32>
      tpu.vector_store %arg13[%c0_7, %c0_8], %15 {strides = array<i32>} : memref<8x32xf32, #tpu.memory_space<vmem>>, vector<8x32xf32>,
      %c0_9 = arith.constant 0 : index
      %c0_10 = arith.constant 0 : index
      %17 = vector.load %arg6[%c0_9, %c0_10] : memref<8x32xf32, #tpu.memory_space<vmem>>, vector<8x32xf32>
      %c0_11 = arith.constant 0 : index
      %c0_12 = arith.constant 0 : index
      %18 = vector.load %arg14[%c0_11, %c0_12] : memref<8x32xf32, #tpu.memory_space<vmem>>, vector<8x32xf32>
      tpu.vector_store %arg14[%c0_11, %c0_12], %17 {strides = array<i32>} : memref<8x32xf32, #tpu.memory_space<vmem>>, vector<8x32xf32>,
    } else {
    }
    %c0 = arith.constant 0 : index
    %4 = memref.load %arg2[%c0] : memref<1xi32, #tpu.memory_space<smem>>
    %5 = arith.cmpi slt, %0, %4 : i32
    %6 = arith.extui %5 : i1 to i32
    %c0_i32_1 = arith.constant 0 : i32
    %7 = arith.cmpi ne, %6, %c0_i32_1 : i32
    scf.if %7 {
      %c0_5 = arith.constant 0 : index
      %c0_6 = arith.constant 0 : index
      %15 = vector.load %arg4[%c0_5, %c0_6] : memref<32x16xf32, #tpu.memory_space<vmem>>, vector<32x16xf32>
      %c0_7 = arith.constant 0 : index
      %c0_8 = arith.constant 0 : index
      %16 = vector.load %arg7[%c0_7, %c0_8] : memref<16x128xf32, #tpu.memory_space<vmem>>, vector<16x128xf32>
      %cst = arith.constant dense<0.000000e+00> : vector<32x128xf32>
      %17 = tpu.matmul %15, %16, %cst {dimension_numbers = #tpu.dot_dimension_numbers<[1], [0], [0], [1], [0, 0, 1, 1], [], []>} : vector<32x16xf32>, vector<16x128xf32>, vector<32x128xf32> -> vector<32x128xf32>
      %c0_9 = arith.constant 0 : index
      %c0_10 = arith.constant 0 : index
      %18 = vector.load %arg9[%c0_9, %c0_10] : memref<1x128xf32, #tpu.memory_space<vmem>>, vector<1x128xf32>
      %19 = vector.broadcast %18 : vector<1x128xf32> to vector<32x128xf32>
      %20 = arith.addf %17, %19 : vector<32x128xf32>
      %c0_11 = arith.constant 0 : index
      %c0_12 = arith.constant 0 : index
      %21 = vector.load %arg15[%c0_11, %c0_12] : memref<32x128xf32, #tpu.memory_space<vmem>>, vector<32x128xf32>
      tpu.vector_store %arg15[%c0_11, %c0_12], %20 {strides = array<i32>} : memref<32x128xf32, #tpu.memory_space<vmem>>, vector<32x128xf32>,
      %c0_13 = arith.constant 0 : index
      %c0_14 = arith.constant 0 : index
      %22 = vector.load %arg3[%c0_13, %c0_14] : memref<8x1xi32, #tpu.memory_space<vmem>>, vector<8x1xi32>
      %c0_15 = arith.constant 0 : index
      %c0_16 = arith.constant 0 : index
      %23 = vector.load %arg8[%c0_15, %c0_16] : memref<32x128xf32, #tpu.memory_space<vmem>>, vector<32x128xf32>
      %c0_17 = arith.constant 0 : index
      %c0_18 = arith.constant 0 : index
      %24 = vector.load %arg13[%c0_17, %c0_18] : memref<8x32xf32, #tpu.memory_space<vmem>>, vector<8x32xf32>
      %c0_19 = arith.constant 0 : index
      %c0_20 = arith.constant 0 : index
      %25 = vector.load %arg14[%c0_19, %c0_20] : memref<8x32xf32, #tpu.memory_space<vmem>>, vector<8x32xf32>
      %c0_i32_21 = arith.constant 0 : i32
      %c8_i32 = arith.constant 8 : i32
      %26 = arith.muli %c0_i32_21, %c8_i32 : i32
      %27 = tpu.assume_multiple %26, 8 : i32
      %28 = arith.index_cast %27 : i32 to index
      %c0_22 = arith.constant 0 : index
      %29 = vector.load %arg15[%28, %c0_22] : memref<32x128xf32, #tpu.memory_space<vmem>>, vector<8x128xf32>
      %cst_23 = arith.constant dense<0.000000e+00> : vector<8x128xf32>
      %30 = tpu.matmul %24, %23, %cst_23 {dimension_numbers = #tpu.dot_dimension_numbers<[1], [0], [0], [1], [0, 0, 1, 1], [], []>} : vector<8x32xf32>, vector<32x128xf32>, vector<8x128xf32> -> vector<8x128xf32>
      %31 = arith.addf %29, %30 : vector<8x128xf32>
      %32 = arith.negf %31 : vector<8x128xf32>
      %33 = math.exp %32 : vector<8x128xf32>
      %cst_24 = arith.constant 1.000000e+00 : f32
      %34 = vector.broadcast %cst_24 : f32 to vector<8x128xf32>
      %35 = arith.addf %34, %33 : vector<8x128xf32>
      %36 = arith.divf %34, %35 : vector<8x128xf32>
      %37 = math.tanh %31 : vector<8x128xf32>
      %38 = vector.extract_strided_slice %36 {offsets = [0, 0], sizes = [8, 32], strides = [1, 1]} : vector<8x128xf32> to vector<8x32xf32>
      %39 = vector.extract_strided_slice %36 {offsets = [0, 32], sizes = [8, 32], strides = [1, 1]} : vector<8x128xf32> to vector<8x32xf32>
      %40 = vector.extract_strided_slice %37 {offsets = [0, 64], sizes = [8, 32], strides = [1, 1]} : vector<8x128xf32> to vector<8x32xf32>
      %41 = vector.extract_strided_slice %36 {offsets = [0, 96], sizes = [8, 32], strides = [1, 1]} : vector<8x128xf32> to vector<8x32xf32>
      %42 = arith.mulf %39, %25 : vector<8x32xf32>
      %43 = arith.mulf %38, %40 : vector<8x32xf32>
      %44 = arith.addf %42, %43 : vector<8x32xf32>
      %45 = math.tanh %44 : vector<8x32xf32>
      %46 = arith.mulf %41, %45 : vector<8x32xf32>
      %47 = arith.addi %0, %c0_i32_21 : i32
      %48 = vector.broadcast %47 : i32 to vector<8x1xi32>
      %49 = arith.cmpi slt, %48, %22 : vector<8x1xi32>
      %cst_25 = arith.constant 0.000000e+00 : f32
      %50 = vector.shape_cast %49 : vector<8x1xi1> to vector<8x1xi1>
      %51 = vector.broadcast %50 : vector<8x1xi1> to vector<8x32xi1>
      %52 = vector.broadcast %cst_25 : f32 to vector<8x32xf32>
      %53 = arith.select %51, %46, %52 : vector<8x32xi1>, vector<8x32xf32>
      %54 = arith.index_cast %c0_i32_21 : i32 to index
      %c0_26 = arith.constant 0 : index
      %c0_27 = arith.constant 0 : index
      %55 = vector.load %arg10[%54, %c0_26, %c0_27] : memref<4x8x32xf32, #tpu.memory_space<vmem>>, vector<1x8x32xf32>
      %56 = vector.shape_cast %55 : vector<1x8x32xf32> to vector<8x32xf32>
      %57 = vector.shape_cast %53 : vector<8x32xf32> to vector<1x8x32xf32>
      tpu.vector_store %arg10[%54, %c0_26, %c0_27], %57 {strides = array<i32>} : memref<4x8x32xf32, #tpu.memory_space<vmem>>, vector<1x8x32xf32>,
      %58 = vector.shape_cast %49 : vector<8x1xi1> to vector<8x1xi1>
      %59 = vector.broadcast %58 : vector<8x1xi1> to vector<8x32xi1>
      %60 = arith.select %59, %46, %24 : vector<8x32xi1>, vector<8x32xf32>
      %61 = vector.shape_cast %49 : vector<8x1xi1> to vector<8x1xi1>
      %62 = vector.broadcast %61 : vector<8x1xi1> to vector<8x32xi1>
      %63 = arith.select %62, %44, %25 : vector<8x32xi1>, vector<8x32xf32>
      %c1_i32_28 = arith.constant 1 : i32
      %c8_i32_29 = arith.constant 8 : i32
      %64 = arith.muli %c1_i32_28, %c8_i32_29 : i32
      %65 = tpu.assume_multiple %64, 8 : i32
      %66 = arith.index_cast %65 : i32 to index
      %c0_30 = arith.constant 0 : index
      %67 = vector.load %arg15[%66, %c0_30] : memref<32x128xf32, #tpu.memory_space<vmem>>, vector<8x128xf32>
      %cst_31 = arith.constant dense<0.000000e+00> : vector<8x128xf32>
      %68 = tpu.matmul %60, %23, %cst_31 {dimension_numbers = #tpu.dot_dimension_numbers<[1], [0], [0], [1], [0, 0, 1, 1], [], []>} : vector<8x32xf32>, vector<32x128xf32>, vector<8x128xf32> -> vector<8x128xf32>
      %69 = arith.addf %67, %68 : vector<8x128xf32>
      %70 = arith.negf %69 : vector<8x128xf32>
      %71 = math.exp %70 : vector<8x128xf32>
      %cst_32 = arith.constant 1.000000e+00 : f32
      %72 = vector.broadcast %cst_32 : f32 to vector<8x128xf32>
      %73 = arith.addf %72, %71 : vector<8x128xf32>
      %74 = arith.divf %72, %73 : vector<8x128xf32>
      %75 = math.tanh %69 : vector<8x128xf32>
      %76 = vector.extract_strided_slice %74 {offsets = [0, 0], sizes = [8, 32], strides = [1, 1]} : vector<8x128xf32> to vector<8x32xf32>
      %77 = vector.extract_strided_slice %74 {offsets = [0, 32], sizes = [8, 32], strides = [1, 1]} : vector<8x128xf32> to vector<8x32xf32>
      %78 = vector.extract_strided_slice %75 {offsets = [0, 64], sizes = [8, 32], strides = [1, 1]} : vector<8x128xf32> to vector<8x32xf32>
      %79 = vector.extract_strided_slice %74 {offsets = [0, 96], sizes = [8, 32], strides = [1, 1]} : vector<8x128xf32> to vector<8x32xf32>
      %80 = arith.mulf %77, %63 : vector<8x32xf32>
      %81 = arith.mulf %76, %78 : vector<8x32xf32>
      %82 = arith.addf %80, %81 : vector<8x32xf32>
      %83 = math.tanh %82 : vector<8x32xf32>
      %84 = arith.mulf %79, %83 : vector<8x32xf32>
      %85 = arith.addi %0, %c1_i32_28 : i32
      %86 = vector.broadcast %85 : i32 to vector<8x1xi32>
      %87 = arith.cmpi slt, %86, %22 : vector<8x1xi32>
      %cst_33 = arith.constant 0.000000e+00 : f32
      %88 = vector.shape_cast %87 : vector<8x1xi1> to vector<8x1xi1>
      %89 = vector.broadcast %88 : vector<8x1xi1> to vector<8x32xi1>
      %90 = vector.broadcast %cst_33 : f32 to vector<8x32xf32>
      %91 = arith.select %89, %84, %90 : vector<8x32xi1>, vector<8x32xf32>
      %92 = arith.index_cast %c1_i32_28 : i32 to index
      %c0_34 = arith.constant 0 : index
      %c0_35 = arith.constant 0 : index
      %93 = vector.load %arg10[%92, %c0_34, %c0_35] : memref<4x8x32xf32, #tpu.memory_space<vmem>>, vector<1x8x32xf32>
      %94 = vector.shape_cast %93 : vector<1x8x32xf32> to vector<8x32xf32>
      %95 = vector.shape_cast %91 : vector<8x32xf32> to vector<1x8x32xf32>
      tpu.vector_store %arg10[%92, %c0_34, %c0_35], %95 {strides = array<i32>} : memref<4x8x32xf32, #tpu.memory_space<vmem>>, vector<1x8x32xf32>,
      %96 = vector.shape_cast %87 : vector<8x1xi1> to vector<8x1xi1>
      %97 = vector.broadcast %96 : vector<8x1xi1> to vector<8x32xi1>
      %98 = arith.select %97, %84, %60 : vector<8x32xi1>, vector<8x32xf32>
      %99 = vector.shape_cast %87 : vector<8x1xi1> to vector<8x1xi1>
      %100 = vector.broadcast %99 : vector<8x1xi1> to vector<8x32xi1>
      %101 = arith.select %100, %82, %63 : vector<8x32xi1>, vector<8x32xf32>
      %c2_i32 = arith.constant 2 : i32
      %c8_i32_36 = arith.constant 8 : i32
      %102 = arith.muli %c2_i32, %c8_i32_36 : i32
      %103 = tpu.assume_multiple %102, 8 : i32
      %104 = arith.index_cast %103 : i32 to index
      %c0_37 = arith.constant 0 : index
      %105 = vector.load %arg15[%104, %c0_37] : memref<32x128xf32, #tpu.memory_space<vmem>>, vector<8x128xf32>
      %cst_38 = arith.constant dense<0.000000e+00> : vector<8x128xf32>
      %106 = tpu.matmul %98, %23, %cst_38 {dimension_numbers = #tpu.dot_dimension_numbers<[1], [0], [0], [1], [0, 0, 1, 1], [], []>} : vector<8x32xf32>, vector<32x128xf32>, vector<8x128xf32> -> vector<8x128xf32>
      %107 = arith.addf %105, %106 : vector<8x128xf32>
      %108 = arith.negf %107 : vector<8x128xf32>
      %109 = math.exp %108 : vector<8x128xf32>
      %cst_39 = arith.constant 1.000000e+00 : f32
      %110 = vector.broadcast %cst_39 : f32 to vector<8x128xf32>
      %111 = arith.addf %110, %109 : vector<8x128xf32>
      %112 = arith.divf %110, %111 : vector<8x128xf32>
      %113 = math.tanh %107 : vector<8x128xf32>
      %114 = vector.extract_strided_slice %112 {offsets = [0, 0], sizes = [8, 32], strides = [1, 1]} : vector<8x128xf32> to vector<8x32xf32>
      %115 = vector.extract_strided_slice %112 {offsets = [0, 32], sizes = [8, 32], strides = [1, 1]} : vector<8x128xf32> to vector<8x32xf32>
      %116 = vector.extract_strided_slice %113 {offsets = [0, 64], sizes = [8, 32], strides = [1, 1]} : vector<8x128xf32> to vector<8x32xf32>
      %117 = vector.extract_strided_slice %112 {offsets = [0, 96], sizes = [8, 32], strides = [1, 1]} : vector<8x128xf32> to vector<8x32xf32>
      %118 = arith.mulf %115, %101 : vector<8x32xf32>
      %119 = arith.mulf %114, %116 : vector<8x32xf32>
      %120 = arith.addf %118, %119 : vector<8x32xf32>
      %121 = math.tanh %120 : vector<8x32xf32>
      %122 = arith.mulf %117, %121 : vector<8x32xf32>
      %123 = arith.addi %0, %c2_i32 : i32
      %124 = vector.broadcast %123 : i32 to vector<8x1xi32>
      %125 = arith.cmpi slt, %124, %22 : vector<8x1xi32>
      %cst_40 = arith.constant 0.000000e+00 : f32
      %126 = vector.shape_cast %125 : vector<8x1xi1> to vector<8x1xi1>
      %127 = vector.broadcast %126 : vector<8x1xi1> to vector<8x32xi1>
      %128 = vector.broadcast %cst_40 : f32 to vector<8x32xf32>
      %129 = arith.select %127, %122, %128 : vector<8x32xi1>, vector<8x32xf32>
      %130 = arith.index_cast %c2_i32 : i32 to index
      %c0_41 = arith.constant 0 : index
      %c0_42 = arith.constant 0 : index
      %131 = vector.load %arg10[%130, %c0_41, %c0_42] : memref<4x8x32xf32, #tpu.memory_space<vmem>>, vector<1x8x32xf32>
      %132 = vector.shape_cast %131 : vector<1x8x32xf32> to vector<8x32xf32>
      %133 = vector.shape_cast %129 : vector<8x32xf32> to vector<1x8x32xf32>
      tpu.vector_store %arg10[%130, %c0_41, %c0_42], %133 {strides = array<i32>} : memref<4x8x32xf32, #tpu.memory_space<vmem>>, vector<1x8x32xf32>,
      %134 = vector.shape_cast %125 : vector<8x1xi1> to vector<8x1xi1>
      %135 = vector.broadcast %134 : vector<8x1xi1> to vector<8x32xi1>
      %136 = arith.select %135, %122, %98 : vector<8x32xi1>, vector<8x32xf32>
      %137 = vector.shape_cast %125 : vector<8x1xi1> to vector<8x1xi1>
      %138 = vector.broadcast %137 : vector<8x1xi1> to vector<8x32xi1>
      %139 = arith.select %138, %120, %101 : vector<8x32xi1>, vector<8x32xf32>
      %c3_i32 = arith.constant 3 : i32
      %c8_i32_43 = arith.constant 8 : i32
      %140 = arith.muli %c3_i32, %c8_i32_43 : i32
      %141 = tpu.assume_multiple %140, 8 : i32
      %142 = arith.index_cast %141 : i32 to index
      %c0_44 = arith.constant 0 : index
      %143 = vector.load %arg15[%142, %c0_44] : memref<32x128xf32, #tpu.memory_space<vmem>>, vector<8x128xf32>
      %cst_45 = arith.constant dense<0.000000e+00> : vector<8x128xf32>
      %144 = tpu.matmul %136, %23, %cst_45 {dimension_numbers = #tpu.dot_dimension_numbers<[1], [0], [0], [1], [0, 0, 1, 1], [], []>} : vector<8x32xf32>, vector<32x128xf32>, vector<8x128xf32> -> vector<8x128xf32>
      %145 = arith.addf %143, %144 : vector<8x128xf32>
      %146 = arith.negf %145 : vector<8x128xf32>
      %147 = math.exp %146 : vector<8x128xf32>
      %cst_46 = arith.constant 1.000000e+00 : f32
      %148 = vector.broadcast %cst_46 : f32 to vector<8x128xf32>
      %149 = arith.addf %148, %147 : vector<8x128xf32>
      %150 = arith.divf %148, %149 : vector<8x128xf32>
      %151 = math.tanh %145 : vector<8x128xf32>
      %152 = vector.extract_strided_slice %150 {offsets = [0, 0], sizes = [8, 32], strides = [1, 1]} : vector<8x128xf32> to vector<8x32xf32>
      %153 = vector.extract_strided_slice %150 {offsets = [0, 32], sizes = [8, 32], strides = [1, 1]} : vector<8x128xf32> to vector<8x32xf32>
      %154 = vector.extract_strided_slice %151 {offsets = [0, 64], sizes = [8, 32], strides = [1, 1]} : vector<8x128xf32> to vector<8x32xf32>
      %155 = vector.extract_strided_slice %150 {offsets = [0, 96], sizes = [8, 32], strides = [1, 1]} : vector<8x128xf32> to vector<8x32xf32>
      %156 = arith.mulf %153, %139 : vector<8x32xf32>
      %157 = arith.mulf %152, %154 : vector<8x32xf32>
      %158 = arith.addf %156, %157 : vector<8x32xf32>
      %159 = math.tanh %158 : vector<8x32xf32>
      %160 = arith.mulf %155, %159 : vector<8x32xf32>
      %161 = arith.addi %0, %c3_i32 : i32
      %162 = vector.broadcast %161 : i32 to vector<8x1xi32>
      %163 = arith.cmpi slt, %162, %22 : vector<8x1xi32>
      %cst_47 = arith.constant 0.000000e+00 : f32
      %164 = vector.shape_cast %163 : vector<8x1xi1> to vector<8x1xi1>
      %165 = vector.broadcast %164 : vector<8x1xi1> to vector<8x32xi1>
      %166 = vector.broadcast %cst_47 : f32 to vector<8x32xf32>
      %167 = arith.select %165, %160, %166 : vector<8x32xi1>, vector<8x32xf32>
      %168 = arith.index_cast %c3_i32 : i32 to index
      %c0_48 = arith.constant 0 : index
      %c0_49 = arith.constant 0 : index
      %169 = vector.load %arg10[%168, %c0_48, %c0_49] : memref<4x8x32xf32, #tpu.memory_space<vmem>>, vector<1x8x32xf32>
      %170 = vector.shape_cast %169 : vector<1x8x32xf32> to vector<8x32xf32>
      %171 = vector.shape_cast %167 : vector<8x32xf32> to vector<1x8x32xf32>
      tpu.vector_store %arg10[%168, %c0_48, %c0_49], %171 {strides = array<i32>} : memref<4x8x32xf32, #tpu.memory_space<vmem>>, vector<1x8x32xf32>,
      %172 = vector.shape_cast %163 : vector<8x1xi1> to vector<8x1xi1>
      %173 = vector.broadcast %172 : vector<8x1xi1> to vector<8x32xi1>
      %174 = arith.select %173, %160, %136 : vector<8x32xi1>, vector<8x32xf32>
      %175 = vector.shape_cast %163 : vector<8x1xi1> to vector<8x1xi1>
      %176 = vector.broadcast %175 : vector<8x1xi1> to vector<8x32xi1>
      %177 = arith.select %176, %158, %139 : vector<8x32xi1>, vector<8x32xf32>
      %c4_i32_50 = arith.constant 4 : i32
      %c0_51 = arith.constant 0 : index
      %c0_52 = arith.constant 0 : index
      %178 = vector.load %arg13[%c0_51, %c0_52] : memref<8x32xf32, #tpu.memory_space<vmem>>, vector<8x32xf32>
      tpu.vector_store %arg13[%c0_51, %c0_52], %174 {strides = array<i32>} : memref<8x32xf32, #tpu.memory_space<vmem>>, vector<8x32xf32>,
      %c0_53 = arith.constant 0 : index
      %c0_54 = arith.constant 0 : index
      %179 = vector.load %arg14[%c0_53, %c0_54] : memref<8x32xf32, #tpu.memory_space<vmem>>, vector<8x32xf32>
      tpu.vector_store %arg14[%c0_53, %c0_54], %177 {strides = array<i32>} : memref<8x32xf32, #tpu.memory_space<vmem>>, vector<8x32xf32>,
    } else {
    }
    %c0_2 = arith.constant 0 : index
    %8 = memref.load %arg2[%c0_2] : memref<1xi32, #tpu.memory_space<smem>>
    %9 = arith.cmpi sge, %0, %8 : i32
    %10 = arith.extui %9 : i1 to i32
    %c0_i32_3 = arith.constant 0 : i32
    %11 = arith.cmpi ne, %10, %c0_i32_3 : i32
    scf.if %11 {
      %cst = arith.constant 0.000000e+00 : f32
      %15 = vector.broadcast %cst : f32 to vector<4x8x32xf32>
      %c0_5 = arith.constant 0 : index
      %c0_6 = arith.constant 0 : index
      %c0_7 = arith.constant 0 : index
      %16 = vector.load %arg10[%c0_5, %c0_6, %c0_7] : memref<4x8x32xf32, #tpu.memory_space<vmem>>, vector<4x8x32xf32>
      tpu.vector_store %arg10[%c0_5, %c0_6, %c0_7], %15 {strides = array<i32>} : memref<4x8x32xf32, #tpu.memory_space<vmem>>, vector<4x8x32xf32>,
    } else {
    }
    %c1_i32 = arith.constant 1 : i32
    %12 = arith.cmpi eq, %arg1, %c1_i32 : i32
    %13 = arith.extui %12 : i1 to i32
    %c0_i32_4 = arith.constant 0 : i32
    %14 = arith.cmpi ne, %13, %c0_i32_4 : i32
    scf.if %14 {
      %c0_5 = arith.constant 0 : index
      %c0_6 = arith.constant 0 : index
      %15 = vector.load %arg13[%c0_5, %c0_6] : memref<8x32xf32, #tpu.memory_space<vmem>>, vector<8x32xf32>
      %c0_7 = arith.constant 0 : index
      %c0_8 = arith.constant 0 : index
      %16 = vector.load %arg11[%c0_7, %c0_8] : memref<8x32xf32, #tpu.memory_space<vmem>>, vector<8x32xf32>
      tpu.vector_store %arg11[%c0_7, %c0_8], %15 {strides = array<i32>} : memref<8x32xf32, #tpu.memory_space<vmem>>, vector<8x32xf32>,
      %c0_9 = arith.constant 0 : index
      %c0_10 = arith.constant 0 : index
      %17 = vector.load %arg14[%c0_9, %c0_10] : memref<8x32xf32, #tpu.memory_space<vmem>>, vector<8x32xf32>
      %c0_11 = arith.constant 0 : index
      %c0_12 = arith.constant 0 : index
      %18 = vector.load %arg12[%c0_11, %c0_12] : memref<8x32xf32, #tpu.memory_space<vmem>>, vector<8x32xf32>
      tpu.vector_store %arg12[%c0_11, %c0_12], %17 {strides = array<i32>} : memref<8x32xf32, #tpu.memory_space<vmem>>, vector<8x32xf32>,
    } else {
    }
    return
  }
  func.func @transform_0(%arg0: i32, %arg1: i32, %arg2: memref<1xi32, #tpu.memory_space<smem>>) -> (i32, i32) {
    %c0_i32 = arith.constant 0 : i32
    %c0_i32_0 = arith.constant 0 : i32
    return %arg0, %c0_i32 : i32, i32
  }
  func.func @transform_1(%arg0: i32, %arg1: i32, %arg2: memref<1xi32, #tpu.memory_space<smem>>) -> (i32, i32) {
    %c2_i32 = arith.constant 2 : i32
    %0 = arith.muli %arg0, %c2_i32 : i32
    %1 = arith.addi %0, %arg1 : i32
    %c0_i32 = arith.constant 0 : i32
    %c0_i32_0 = arith.constant 0 : i32
    return %1, %c0_i32 : i32, i32
  }
  func.func @transform_2(%arg0: i32, %arg1: i32, %arg2: memref<1xi32, #tpu.memory_space<smem>>) -> (i32, i32) {
    %c0_i32 = arith.constant 0 : i32
    %c0_i32_0 = arith.constant 0 : i32
    return %arg0, %c0_i32 : i32, i32
  }
  func.func @transform_3(%arg0: i32, %arg1: i32, %arg2: memref<1xi32, #tpu.memory_space<smem>>) -> (i32, i32) {
    %c0_i32 = arith.constant 0 : i32
    %c0_i32_0 = arith.constant 0 : i32
    return %arg0, %c0_i32 : i32, i32
  }
  func.func @transform_4(%arg0: i32, %arg1: i32, %arg2: memref<1xi32, #tpu.memory_space<smem>>) -> (i32, i32) {
    %c0_i32 = arith.constant 0 : i32
    %c0_i32_0 = arith.constant 0 : i32
    %c0_i32_1 = arith.constant 0 : i32
    return %c0_i32, %c0_i32_0 : i32, i32
  }
  func.func @transform_5(%arg0: i32, %arg1: i32, %arg2: memref<1xi32, #tpu.memory_space<smem>>) -> (i32, i32) {
    %c0_i32 = arith.constant 0 : i32
    %c0_i32_0 = arith.constant 0 : i32
    %c0_i32_1 = arith.constant 0 : i32
    return %c0_i32, %c0_i32_0 : i32, i32
  }
  func.func @transform_6(%arg0: i32, %arg1: i32, %arg2: memref<1xi32, #tpu.memory_space<smem>>) -> (i32, i32) {
    %c0_i32 = arith.constant 0 : i32
    %c0_i32_0 = arith.constant 0 : i32
    %c0_i32_1 = arith.constant 0 : i32
    return %c0_i32, %c0_i32_0 : i32, i32
  }
  func.func @transform_7(%arg0: i32, %arg1: i32, %arg2: memref<1xi32, #tpu.memory_space<smem>>) -> (i32, i32, i32) {
    %c2_i32 = arith.constant 2 : i32
    %0 = arith.muli %arg0, %c2_i32 : i32
    %1 = arith.addi %0, %arg1 : i32
    %c0_i32 = arith.constant 0 : i32
    %c0_i32_0 = arith.constant 0 : i32
    %c0_i32_1 = arith.constant 0 : i32
    return %1, %c0_i32, %c0_i32_0 : i32, i32, i32
  }
  func.func @transform_8(%arg0: i32, %arg1: i32, %arg2: memref<1xi32, #tpu.memory_space<smem>>) -> (i32, i32) {
    %c0_i32 = arith.constant 0 : i32
    %c0_i32_0 = arith.constant 0 : i32
    return %arg0, %c0_i32 : i32, i32
  }
  func.func @transform_9(%arg0: i32, %arg1: i32, %arg2: memref<1xi32, #tpu.memory_space<smem>>) -> (i32, i32) {
    %c0_i32 = arith.constant 0 : i32
    %c0_i32_0 = arith.constant 0 : i32
    return %arg0, %c0_i32 : i32, i32
  }
}

</mosaic_0001>

<llo_original>
// kernel: _encoder_padded.1
$region0: #{_encoder_padded.1}
  #allocation0 [shape = 'u32[]', space=smem, size = 0x4, offset = 0x4, fixed_abs, tag = 'smem constant byte address 0x4 - core index']
  #allocation1 [shape = 'u32[144,128]{1,0:T(1,128)}', space=vmem, size = 0x12000, scoped, tag = 'internal scratch']
  #allocation2 [shape = 'f32[8,32]{1,0:T(8,128)}', space=vmem, size = 0x1000, scoped, tag = 'scratch operand']
  #allocation3 [shape = 'f32[8,32]{1,0:T(8,128)}', space=vmem, size = 0x1000, scoped, tag = 'scratch operand']
  #allocation4 [shape = 'f32[32,128]{1,0:T(8,128)}', space=vmem, size = 0x4000, scoped, tag = 'scratch operand']
  #allocation5 [shape = 's32[1]{0}', space=sflag, size = 0x4, scoped, tag = 'scoped memory for _encoder_padded.1']
  #allocation6 [shape = 's32[1]{0:T(128)S(6)}', space=smem, size = 0x200, scoped, tag = 'prefetched SMEM operand 0']
  %s0 = inlined_call_operand.<no memory space> [shape: s32[1], index: 0, kind: input, shape index: {}]
  %s1 = inlined_call_operand.vmem [shape: s32[8,1], index: 1, kind: input, shape index: {}]
  %s2 = inlined_call_operand.vmem [shape: f32[64,16], index: 2, kind: input, shape index: {}]
  %s3 = inlined_call_operand.vmem [shape: f32[8,32], index: 3, kind: input, shape index: {}]
  %s4 = inlined_call_operand.vmem [shape: f32[8,32], index: 4, kind: input, shape index: {}]
  %s5 = inlined_call_operand.vmem [shape: f32[16,128], index: 5, kind: input, shape index: {}]
  %s6 = inlined_call_operand.vmem [shape: f32[32,128], index: 6, kind: input, shape index: {}]
  %s7 = inlined_call_operand.vmem [shape: f32[1,128], index: 7, kind: input, shape index: {}]
  %s8 = inlined_call_operand.vmem [shape: f32[8,8,32], index: 8, kind: output, shape index: {0}]
  %s9 = inlined_call_operand.hbm [shape: f32[8,32], index: 9, kind: output, shape index: {1}]
  %s10 = inlined_call_operand.hbm [shape: f32[8,32], index: 10, kind: output, shape index: {2}]
  %11 = xla_tuple %s8, %s9, %s10
  %s12 = sld [smem:[#allocation0]]
  $region93: #{_encoder_padded.1} parent=0
    _
  %s14 = ssub.s32 1, %s12
  %s15 = scalar_select 0, %s14, %s12
  %16 = sst [smem:[#allocation6]] %s0
  $region1: #{_encoder_padded.1} parent=0
    #allocation7 [shape = 'u8[4096]{0}', space=vmem, size = 0x1000, scoped, tag = 'output window, operand 1, single buffered']
    #allocation8 [shape = 's32[2]{0}', space=sflag, size = 0x8, scoped, tag = 'scoped memory for _encoder_padded.1']
    #allocation9 [shape = 'u8[4096]{0}', space=vmem, size = 0x1000, scoped, tag = 'output window, operand 2, single buffered']
    #allocation10 [shape = 's32[1]{0}', space=sflag, size = 0x4, scoped, tag = 'scoped memory for _encoder_padded.1']
    %17 = vsyncpa [#allocation8], 0
    %18 = vsyncpa [#allocation10], 0
    loop: start=0, step=1, limit=4
    $region2: #{_encoder_padded.1} parent=1 // loop_pre_header
      _
    $region3: #{_encoder_padded.1} parent=1 // loop_header
      %s20 = sphi 0, %s24
      %p21 = scmp.ge.s32.totalorder %s20, 4
      %s27 = sphi 0, %s39
      %s28 = sphi 0, %s35
      %s29 = sphi 0, %s27
      %s30 = sphi 0, %s28
      %s31 = sphi 0, %s29
      %s32 = sphi 0, %s30
      %s42 = sphi 0, %s44
      %s45 = sphi 0, %s42
      %s46 = sphi 0, %s45
      %s62 = sphi 0, %s46
      %s72 = sphi 0, %s74
      %s75 = sphi 0, %s72
      %s76 = sphi 0, %s75
      %s92 = sphi 0, %s76
      %s98 = sphi 0, %s100
      %s101 = sphi 0, %s98
      %s102 = sphi 0, %s101
      %s118 = sphi 0, %s102
      %s124 = sphi 0, %s126
      %s127 = sphi 0, %s124
      %s128 = sphi 0, %s127
      %s144 = sphi 0, %s128
      %s148 = sphi 0, %s148
      %s150 = sphi 0, %s148
      %s151 = sphi 0, %s150
      %s165 = sphi 0, %s151
      %s169 = sphi 0, %s169
      %s171 = sphi 0, %s169
      %s172 = sphi 0, %s171
      %s186 = sphi 0, %s172
      %s190 = sphi 0, %s190
      %s192 = sphi 0, %s190
      %s193 = sphi 0, %s192
      %s207 = sphi 0, %s193
      %s217 = sphi 0, %s219
      %s220 = sphi 0, %s217
      %s221 = sphi 0, %s220
      %s237 = sphi 0, %s221
      %s243 = sphi 0, %s245
      %s246 = sphi 0, %s243
      %s247 = sphi 0, %s246
      %s263 = sphi 0, %s247
      %s269 = sphi 0, %s271
      %s272 = sphi 0, %s269
      %s273 = sphi 0, %s272
      %s289 = sphi 0, %s273
    $region4: #{_encoder_padded.1} parent=1 // loop_header_branch
      %23 = sbr.rel (%p21) target = $region8
    $region5: #{_encoder_padded.1} parent=1 // loop_body
      %s25 = ssub.s32 %s20, 1
      %s26 = ssub.s32 %s20, 2
      %s33 = sadd.s32 1, %s28
      %p34 = scmp.ge.s32.totalorder %s33, 2
      %s35 = scalar_select %p34, 0, %s33
      %s36 = sadd.s32 1, %s27
      %s37 = scalar_select %p34, %s36, %s27
      %p38 = scmp.ge.s32.totalorder %s37, 1
      %s39 = scalar_select %p38, 0, %s37
      %s40 = ssub.s32 %s27, %s39
      %p41 = scmp.eq.s32.totalorder %s40, 0
      %s43 = sadd.s32 %s42, 1
      %s44 = scalar_select %p41, %s42, %s43
      %p47 = pneg %p41
      %p48 = scmp.eq.s32.totalorder %s20, 1
      %p49 = por %p47, %p48
      %p50 = scmp.ne.s32.totalorder %s42, %s45
      %p51 = scmp.eq.s32.totalorder %s20, 0
      %p52 = por %p50, %p51
      %p53 = scmp.ne.s32.totalorder %s42, %s45
      %p54 = scmp.eq.s32.totalorder %s25, 1
      %p55 = por %p53, %p54
      %p56 = scmp.ne.s32.totalorder %s45, %s46
      %p57 = scmp.eq.s32.totalorder %s25, 0
      %p58 = por %p56, %p57
      %p59 = scmp.ne.s32.totalorder %s45, %s46
      %p60 = scmp.eq.s32.totalorder %s26, 1
      %p61 = por %p59, %p60
      %p63 = scmp.ne.s32.totalorder %s46, %s62
      %p64 = scmp.eq.s32.totalorder %s26, 0
      %p65 = por %p63, %p64
      %s66 = smul.u32 %s27, 2
      %s67 = sadd.s32 %s66, %s28
      %s68 = smul.u32 %s39, 2
      %s69 = sadd.s32 %s68, %s35
      %s70 = ssub.s32 %s67, %s69
      %p71 = scmp.eq.s32.totalorder %s70, 0
      %s73 = sadd.s32 %s72, 1
      %s74 = scalar_select %p71, %s72, %s73
      %p77 = pneg %p71
      %p78 = scmp.eq.s32.totalorder %s20, 1
      %p79 = por %p77, %p78
      %p80 = scmp.ne.s32.totalorder %s72, %s75
      %p81 = scmp.eq.s32.totalorder %s20, 0
      %p82 = por %p80, %p81
      %p83 = scmp.ne.s32.totalorder %s72, %s75
      %p84 = scmp.eq.s32.totalorder %s25, 1
      %p85 = por %p83, %p84
      %p86 = scmp.ne.s32.totalorder %s75, %s76
      %p87 = scmp.eq.s32.totalorder %s25, 0
      %p88 = por %p86, %p87
      %p89 = scmp.ne.s32.totalorder %s75, %s76
      %p90 = scmp.eq.s32.totalorder %s26, 1
      %p91 = por %p89, %p90
      %p93 = scmp.ne.s32.totalorder %s76, %s92
      %p94 = scmp.eq.s32.totalorder %s26, 0
      %p95 = por %p93, %p94
      %s96 = ssub.s32 %s27, %s39
      %p97 = scmp.eq.s32.totalorder %s96, 0
      %s99 = sadd.s32 %s98, 1
      %s100 = scalar_select %p97, %s98, %s99
      %p103 = pneg %p97
      %p104 = scmp.eq.s32.totalorder %s20, 1
      %p105 = por %p103, %p104
      %p106 = scmp.ne.s32.totalorder %s98, %s101
      %p107 = scmp.eq.s32.totalorder %s20, 0
      %p108 = por %p106, %p107
      %p109 = scmp.ne.s32.totalorder %s98, %s101
      %p110 = scmp.eq.s32.totalorder %s25, 1
      %p111 = por %p109, %p110
      %p112 = scmp.ne.s32.totalorder %s101, %s102
      %p113 = scmp.eq.s32.totalorder %s25, 0
      %p114 = por %p112, %p113
      %p115 = scmp.ne.s32.totalorder %s101, %s102
      %p116 = scmp.eq.s32.totalorder %s26, 1
      %p117 = por %p115, %p116
      %p119 = scmp.ne.s32.totalorder %s102, %s118
      %p120 = scmp.eq.s32.totalorder %s26, 0
      %p121 = por %p119, %p120
      %s122 = ssub.s32 %s27, %s39
      %p123 = scmp.eq.s32.totalorder %s122, 0
      %s125 = sadd.s32 %s124, 1
      %s126 = scalar_select %p123, %s124, %s125
      %p129 = pneg %p123
      %p130 = scmp.eq.s32.totalorder %s20, 1
      %p131 = por %p129, %p130
      %p132 = scmp.ne.s32.totalorder %s124, %s127
      %p133 = scmp.eq.s32.totalorder %s20, 0
      %p134 = por %p132, %p133
      %p135 = scmp.ne.s32.totalorder %s124, %s127
      %p136 = scmp.eq.s32.totalorder %s25, 1
      %p137 = por %p135, %p136
      %p138 = scmp.ne.s32.totalorder %s127, %s128
      %p139 = scmp.eq.s32.totalorder %s25, 0
      %p140 = por %p138, %p139
      %p141 = scmp.ne.s32.totalorder %s127, %s128
      %p142 = scmp.eq.s32.totalorder %s26, 1
      %p143 = por %p141, %p142
      %p145 = scmp.ne.s32.totalorder %s128, %s144
      %p146 = scmp.eq.s32.totalorder %s26, 0
      %p147 = por %p145, %p146
      %s149 = sadd.s32 %s148, 1
      %p152 = scmp.eq.s32.totalorder %s20, 1
      %p153 = scmp.ne.s32.totalorder %s148, %s150
      %p154 = scmp.eq.s32.totalorder %s20, 0
      %p155 = por %p153, %p154
      %p156 = scmp.ne.s32.totalorder %s148, %s150
      %p157 = scmp.eq.s32.totalorder %s25, 1
      %p158 = por %p156, %p157
      %p159 = scmp.ne.s32.totalorder %s150, %s151
      %p160 = scmp.eq.s32.totalorder %s25, 0
      %p161 = por %p159, %p160
      %p162 = scmp.ne.s32.totalorder %s150, %s151
      %p163 = scmp.eq.s32.totalorder %s26, 1
      %p164 = por %p162, %p163
      %p166 = scmp.ne.s32.totalorder %s151, %s165
      %p167 = scmp.eq.s32.totalorder %s26, 0
      %p168 = por %p166, %p167
      %s170 = sadd.s32 %s169, 1
      %p173 = scmp.eq.s32.totalorder %s20, 1
      %p174 = scmp.ne.s32.totalorder %s169, %s171
      %p175 = scmp.eq.s32.totalorder %s20, 0
      %p176 = por %p174, %p175
      %p177 = scmp.ne.s32.totalorder %s169, %s171
      %p178 = scmp.eq.s32.totalorder %s25, 1
      %p179 = por %p177, %p178
      %p180 = scmp.ne.s32.totalorder %s171, %s172
      %p181 = scmp.eq.s32.totalorder %s25, 0
      %p182 = por %p180, %p181
      %p183 = scmp.ne.s32.totalorder %s171, %s172
      %p184 = scmp.eq.s32.totalorder %s26, 1
      %p185 = por %p183, %p184
      %p187 = scmp.ne.s32.totalorder %s172, %s186
      %p188 = scmp.eq.s32.totalorder %s26, 0
      %p189 = por %p187, %p188
      %s191 = sadd.s32 %s190, 1
      %p194 = scmp.eq.s32.totalorder %s20, 1
      %p195 = scmp.ne.s32.totalorder %s190, %s192
      %p196 = scmp.eq.s32.totalorder %s20, 0
      %p197 = por %p195, %p196
      %p198 = scmp.ne.s32.totalorder %s190, %s192
      %p199 = scmp.eq.s32.totalorder %s25, 1
      %p200 = por %p198, %p199
      %p201 = scmp.ne.s32.totalorder %s192, %s193
      %p202 = scmp.eq.s32.totalorder %s25, 0
      %p203 = por %p201, %p202
      %p204 = scmp.ne.s32.totalorder %s192, %s193
      %p205 = scmp.eq.s32.totalorder %s26, 1
      %p206 = por %p204, %p205
      %p208 = scmp.ne.s32.totalorder %s193, %s207
      %p209 = scmp.eq.s32.totalorder %s26, 0
      %p210 = por %p208, %p209
      %s211 = smul.u32 %s27, 2
      %s212 = sadd.s32 %s211, %s28
      %s213 = smul.u32 %s39, 2
      %s214 = sadd.s32 %s213, %s35
      %s215 = ssub.s32 %s212, %s214
      %p216 = scmp.eq.s32.totalorder %s215, 0
      %s218 = sadd.s32 %s217, 1
      %s219 = scalar_select %p216, %s217, %s218
      %p222 = pneg %p216
      %p223 = scmp.eq.s32.totalorder %s20, 1
      %p224 = por %p222, %p223
      %p225 = scmp.ne.s32.totalorder %s217, %s220
      %p226 = scmp.eq.s32.totalorder %s20, 0
      %p227 = por %p225, %p226
      %p228 = scmp.ne.s32.totalorder %s217, %s220
      %p229 = scmp.eq.s32.totalorder %s25, 1
      %p230 = por %p228, %p229
      %p231 = scmp.ne.s32.totalorder %s220, %s221
      %p232 = scmp.eq.s32.totalorder %s25, 0
      %p233 = por %p231, %p232
      %p234 = scmp.ne.s32.totalorder %s220, %s221
      %p235 = scmp.eq.s32.totalorder %s26, 1
      %p236 = por %p234, %p235
      %p238 = scmp.ne.s32.totalorder %s221, %s237
      %p239 = scmp.eq.s32.totalorder %s26, 0
      %p240 = por %p238, %p239
      %s241 = ssub.s32 %s27, %s39
      %p242 = scmp.eq.s32.totalorder %s241, 0
      %s244 = sadd.s32 %s243, 1
      %s245 = scalar_select %p242, %s243, %s244
      %p248 = pneg %p242
      %p249 = scmp.eq.s32.totalorder %s20, 1
      %p250 = por %p248, %p249
      %p251 = scmp.ne.s32.totalorder %s243, %s246
      %p252 = scmp.eq.s32.totalorder %s20, 0
      %p253 = por %p251, %p252
      %p254 = scmp.ne.s32.totalorder %s243, %s246
      %p255 = scmp.eq.s32.totalorder %s25, 1
      %p256 = por %p254, %p255
      %p257 = scmp.ne.s32.totalorder %s246, %s247
      %p258 = scmp.eq.s32.totalorder %s25, 0
      %p259 = por %p257, %p258
      %p260 = scmp.ne.s32.totalorder %s246, %s247
      %p261 = scmp.eq.s32.totalorder %s26, 1
      %p262 = por %p260, %p261
      %p264 = scmp.ne.s32.totalorder %s247, %s263
      %p265 = scmp.eq.s32.totalorder %s26, 0
      %p266 = por %p264, %p265
      %s267 = ssub.s32 %s27, %s39
      %p268 = scmp.eq.s32.totalorder %s267, 0
      %s270 = sadd.s32 %s269, 1
      %s271 = scalar_select %p268, %s269, %s270
      %p274 = pneg %p268
      %p275 = scmp.eq.s32.totalorder %s20, 1
      %p276 = por %p274, %p275
      %p277 = scmp.ne.s32.totalorder %s269, %s272
      %p278 = scmp.eq.s32.totalorder %s20, 0
      %p279 = por %p277, %p278
      %p280 = scmp.ne.s32.totalorder %s269, %s272
      %p281 = scmp.eq.s32.totalorder %s25, 1
      %p282 = por %p280, %p281
      %p283 = scmp.ne.s32.totalorder %s272, %s273
      %p284 = scmp.eq.s32.totalorder %s25, 0
      %p285 = por %p283, %p284
      %p286 = scmp.ne.s32.totalorder %s272, %s273
      %p287 = scmp.eq.s32.totalorder %s26, 1
      %p288 = por %p286, %p287
      %p290 = scmp.ne.s32.totalorder %s273, %s289
      %p291 = scmp.eq.s32.totalorder %s26, 0
      %p292 = por %p290, %p291
      %p293 = scmp.le.s32.totalorder 1, %s20
      %p294 = scmp.lt.s32.totalorder %s20, 3
      %p295 = pnand %p293, %p294
      %p296 = pneg %p295
      // Predicated region
      $region9: #{_encoder_padded.1} parent=5 // pred_check
        _
      $region10: #{_encoder_padded.1} parent=5 // pred_check_branch
        %298 = sbr.rel (%p295) target = $region12
      $region11: #{_encoder_padded.1} parent=5 // pred_region
        %s299 = ssub.s32 %s20, 1
        // Predicated region
        $region13: #{_encoder_padded.1} parent=11 // pred_check
          %p300 = pneg %p58
        $region14: #{_encoder_padded.1} parent=11 // pred_check_branch
          %302 = sbr.rel (%p300) target = $region16
        $region15: #{_encoder_padded.1} parent=11 // pred_region
          %p303 = scmp.lt.s32.totalorder %s29, 0
          %s304 = scalar_select %p303, %s29, 0
          %s305 = smul.addr %s304, 8
          %s306 = scalar_lea.vmem %s1, %s305
        $region16: #{_encoder_padded.1} parent=11 // pred_fallthru
          _
        // Predicated region
        $region17: #{_encoder_padded.1} parent=11 // pred_check
          %p307 = pneg %p114
        $region18: #{_encoder_padded.1} parent=11 // pred_check_branch
          %309 = sbr.rel (%p307) target = $region20
        $region19: #{_encoder_padded.1} parent=11 // pred_region
          %p310 = scmp.lt.s32.totalorder %s29, 0
          %s311 = scalar_select %p310, %s29, 0
          %s312 = smul.addr %s311, 8
          %s313 = scalar_lea.vmem %s3, %s312
        $region20: #{_encoder_padded.1} parent=11 // pred_fallthru
          _
        // Predicated region
        $region21: #{_encoder_padded.1} parent=11 // pred_check
          %p314 = pneg %p140
        $region22: #{_encoder_padded.1} parent=11 // pred_check_branch
          %316 = sbr.rel (%p314) target = $region24
        $region23: #{_encoder_padded.1} parent=11 // pred_region
          %p317 = scmp.lt.s32.totalorder %s29, 0
          %s318 = scalar_select %p317, %s29, 0
          %s319 = smul.addr %s318, 8
          %s320 = scalar_lea.vmem %s4, %s319
        $region24: #{_encoder_padded.1} parent=11 // pred_fallthru
          _
        // Predicated region
        $region25: #{_encoder_padded.1} parent=11 // pred_check
          %p321 = pneg %p161
        $region26: #{_encoder_padded.1} parent=11 // pred_check_branch
          %323 = sbr.rel (%p321) target = $region28
        $region27: #{_encoder_padded.1} parent=11 // pred_region
          _
        $region28: #{_encoder_padded.1} parent=11 // pred_fallthru
          _
        // Predicated region
        $region29: #{_encoder_padded.1} parent=11 // pred_check
          %p324 = pneg %p182
        $region30: #{_encoder_padded.1} parent=11 // pred_check_branch
          %326 = sbr.rel (%p324) target = $region32
        $region31: #{_encoder_padded.1} parent=11 // pred_region
          _
        $region32: #{_encoder_padded.1} parent=11 // pred_fallthru
          _
        // Predicated region
        $region33: #{_encoder_padded.1} parent=11 // pred_check
          %p327 = pneg %p203
        $region34: #{_encoder_padded.1} parent=11 // pred_check_branch
          %329 = sbr.rel (%p327) target = $region36
        $region35: #{_encoder_padded.1} parent=11 // pred_region
          _
        $region36: #{_encoder_padded.1} parent=11 // pred_fallthru
          _
      $region12: #{_encoder_padded.1} parent=5 // pred_fallthru
        _
      %p330 = scmp.lt.s32.totalorder %s20, 2
      // Predicated region
      $region37: #{_encoder_padded.1} parent=5 // pred_check
        %p331 = pneg %p330
      $region38: #{_encoder_padded.1} parent=5 // pred_check_branch
        %333 = sbr.rel (%p331) target = $region40
      $region39: #{_encoder_padded.1} parent=5 // pred_region
        // Predicated region
        $region41: #{_encoder_padded.1} parent=39 // pred_check
          %p334 = pneg %p82
        $region42: #{_encoder_padded.1} parent=39 // pred_check_branch
          %336 = sbr.rel (%p334) target = $region44
        $region43: #{_encoder_padded.1} parent=39 // pred_region
          %s337 = smul.u32 %s27, 2
          %s338 = sadd.s32 %s337, %s28
          %s339 = smul.u32 4, %s338
          %p340 = scmp.lt.s32.totalorder %s339, 7
          %s341 = scalar_select %p340, %s339, 7
          %s342 = smul.addr %s341, 8
          %s343 = scalar_lea.vmem %s2, %s342
          %s344 = smul.u32 %s27, 2
          %s345 = sadd.s32 %s344, %s28
          %s346 = smul.u32 4, %s345
        $region44: #{_encoder_padded.1} parent=39 // pred_fallthru
          _
      $region40: #{_encoder_padded.1} parent=5 // pred_fallthru
        _
      %p347 = scmp.le.s32.totalorder 1, %s20
      %p348 = scmp.lt.s32.totalorder %s20, 3
      %p349 = pnand %p347, %p348
      %p350 = pneg %p349
      // Predicated region
      $region45: #{_encoder_padded.1} parent=5 // pred_check
        _
      $region46: #{_encoder_padded.1} parent=5 // pred_check_branch
        %352 = sbr.rel (%p349) target = $region48
      $region47: #{_encoder_padded.1} parent=5 // pred_region
        %s353 = ssub.s32 %s20, 1
        %p354 = scmp.lt.s32.totalorder %s29, 0
        %s355 = scalar_select %p354, %s29, 0
        %s356 = smul.addr %s355, 8
        %s357 = scalar_lea.vmem %s1, %s356
        %p358 = pneg %p58
        %p359 = pneg %p55
        %s360 = smul.u32 %s29, 2
        %s361 = sadd.s32 %s360, %s30
        %s362 = smul.u32 4, %s361
        %p363 = scmp.lt.s32.totalorder %s362, 7
        %s364 = scalar_select %p363, %s362, 7
        %s365 = smul.addr %s364, 8
        %s366 = scalar_lea.vmem %s2, %s365
        %p367 = pneg %p88
        %p368 = pneg %p85
        %p369 = scmp.lt.s32.totalorder %s29, 0
        %s370 = scalar_select %p369, %s29, 0
        %s371 = smul.addr %s370, 8
        %s372 = scalar_lea.vmem %s3, %s371
        %p373 = pneg %p114
        %p374 = pneg %p111
        %p375 = scmp.lt.s32.totalorder %s29, 0
        %s376 = scalar_select %p375, %s29, 0
        %s377 = smul.addr %s376, 8
        %s378 = scalar_lea.vmem %s4, %s377
        %p379 = pneg %p140
        %p380 = pneg %p137
        %p381 = pneg %p161
        %p382 = pneg %p158
        %p383 = pneg %p182
        %p384 = pneg %p179
        %p385 = pneg %p203
        %p386 = pneg %p200
        %p387 = pneg %p233
        %p388 = pneg %p230
        %s389 = smul.u32 %s29, 2
        %s390 = sadd.s32 %s389, %s30
        %s391 = smul.u32 4, %s390
        %p392 = scmp.lt.s32.totalorder %s391, 7
        %s393 = scalar_select %p392, %s391, 7
        %s394 = smul.addr %s393, 8
        %s395 = scalar_lea.vmem %s8, %s394
        %p396 = pneg %p259
        %p397 = pneg %p256
        %p398 = pneg %p285
        %p399 = pneg %p282
        %p400 = scmp.lt.s32.totalorder %s29, 0
        %s401 = scalar_select %p400, %s29, 0
        %s402 = smul.addr %s401, 8
        %s403 = scalar_lea.vmem %s1, %s402
        %s404 = smul.u32 %s29, 2
        %s405 = sadd.s32 %s404, %s30
        %s406 = smul.u32 4, %s405
        %p407 = scmp.lt.s32.totalorder %s406, 7
        %s408 = scalar_select %p407, %s406, 7
        %s409 = smul.addr %s408, 8
        %s410 = scalar_lea.vmem %s2, %s409
        %s411 = smul.u32 %s29, 2
        %s412 = sadd.s32 %s411, %s30
        %s413 = smul.u32 4, %s412
        %p414 = scmp.lt.s32.totalorder %s29, 0
        %s415 = scalar_select %p414, %s29, 0
        %s416 = smul.addr %s415, 8
        %s417 = scalar_lea.vmem %s3, %s416
        %p418 = scmp.lt.s32.totalorder %s29, 0
        %s419 = scalar_select %p418, %s29, 0
        %s420 = smul.addr %s419, 8
        %s421 = scalar_lea.vmem %s4, %s420
        %s422 = smul.u32 %s29, 2
        %s423 = sadd.s32 %s422, %s30
        %s424 = smul.u32 4, %s423
        %p425 = scmp.lt.s32.totalorder %s424, 7
        %s426 = scalar_select %p425, %s424, 7
        %s427 = smul.addr %s426, 8
        %s428 = scalar_lea.vmem %s8, %s427
        %s429 = smul.u32 %s29, 2
        %s430 = sadd.s32 %s429, %s30
        %s431 = smul.u32 4, %s430
        %s432 = smul.u32 %s30, 4
        %p433 = scmp.eq.s32.totalorder %s30, 0
        // Predicated region
        $region49: #{_encoder_padded.1} parent=47 // pred_check
          %p434 = pneg %p433
        $region50: #{_encoder_padded.1} parent=47 // pred_check_branch
          %436 = sbr.rel (%p434) target = $region52
        $region51: #{_encoder_padded.1} parent=47 // pred_region
          %v437 = vld [vmem:[%s417] sm:$0xff]
          %vm438 = vcmask 261120
          %439 = vst.msk [vmem:[#allocation2] sm:$0xff] %vm438, %v437
          %v440 = vld [vmem:[%s421] sm:$0xff]
          %441 = vst.msk [vmem:[#allocation3] sm:$0xff] %vm438, %v440
        $region52: #{_encoder_padded.1} parent=47 // pred_fallthru
          _
        %s442 = sld [smem:[#allocation6]]
        %p443 = scmp.lt.s32.totalorder %s432, %s442
        // Predicated region
        $region53: #{_encoder_padded.1} parent=47 // pred_check
          %p444 = pneg %p443
        $region54: #{_encoder_padded.1} parent=47 // pred_check_branch
          %446 = sbr.rel (%p444) target = $region56
        $region55: #{_encoder_padded.1} parent=47 // pred_region
          %v447 = vld [vmem:[%s410] sm:$0xff]
          %v448 = vld [vmem:[%s410 + $0x8] sm:$0xff]
          %v449 = vld [vmem:[%s410 + $0x10] sm:$0xff]
          %v450 = vld [vmem:[%s410 + $0x18] sm:$0xff]
          %v451 = vld [vmem:[%s5] sm:$0xff]
          %v452 = vld [vmem:[%s5 + $0x8] sm:$0xff]
          %v453 = vld [vmem:[%s7] sm:$0x1]
          %v455 = vlaneseq
          %v456 = vshrl.u32 %v455, 7
          %v457 = vsub.s32 0, %v456
          %v458 = vrot.slane %v453, %v457
          %vm460 = vcmask 130048
          %v462 = vsel %vm460, %v447, 0
          %v465 = vsel %vm460, %v448, 0
          %v468 = vsel %vm460, %v449, 0
          %v471 = vsel %vm460, %v450, 0
          %473 = vmatprep.subr.mxu0 0.0
          %474 = vmatpush1.msra.mxu0 0.0
          %475 = vmatprep.subr.mxu0 0.0
          %476 = vmatpush1.msra.mxu0 0.0
          %477 = vmatprep.subr.mxu0 0.0
          %478 = vmatpush1.msra.mxu0 0.0
          %479 = vmatprep.subr.mxu0 0.0
          %480 = vmatpush1.msra.mxu0 0.0
          %481 = vmatprep.subr.mxu0 0.0
          %482 = vmatpush1.msra.mxu0 0.0
          %483 = vmatprep.subr.mxu0 0.0
          %484 = vmatpush1.msra.mxu0 0.0
          %485 = vmatprep.subr.mxu0 0.0
          %486 = vmatpush1.msra.mxu0 0.0
          %487 = vmatprep.subr.mxu0 0.0
          %488 = vmatpush1.msra.mxu0 0.0
          %489 = vmatprep.subr.mxu0 0.0
          %490 = vmatpush1.msra.mxu0 0.0
          %491 = vmatprep.subr.mxu0 0.0
          %492 = vmatpush1.msra.mxu0 0.0
          %493 = vmatprep.subr.mxu0 0.0
          %494 = vmatpush1.msra.mxu0 0.0
          %495 = vmatprep.subr.mxu0 0.0
          %496 = vmatpush1.msra.mxu0 0.0
          %497 = vmatprep.subr.mxu0 0.0
          %498 = vmatpush1.msra.mxu0 0.0
          %499 = vmatprep.subr.mxu0 0.0
          %500 = vmatpush1.msra.mxu0 0.0
          %501 = vmatprep.subr.mxu0 0.0
          %502 = vmatpush1.msra.mxu0 %v452
          %503 = vmatprep.subr.mxu0 0.0
          %504 = vmatpush1.msra.mxu0 %v451
          %505 = vmatprep.subr.mxu0 0.0
          %506 = vmatpush2.msra.mxu0 0.0
          %507 = vmatprep.subr.mxu0 0.0
          %508 = vmatpush2.msra.mxu0 0.0
          %509 = vmatprep.subr.mxu0 0.0
          %510 = vmatpush2.msra.mxu0 0.0
          %511 = vmatprep.subr.mxu0 0.0
          %512 = vmatpush2.msra.mxu0 0.0
          %513 = vmatprep.subr.mxu0 0.0
          %514 = vmatpush2.msra.mxu0 0.0
          %515 = vmatprep.subr.mxu0 0.0
          %516 = vmatpush2.msra.mxu0 0.0
          %517 = vmatprep.subr.mxu0 0.0
          %518 = vmatpush2.msra.mxu0 0.0
          %519 = vmatprep.subr.mxu0 0.0
          %520 = vmatpush2.msra.mxu0 0.0
          %521 = vmatprep.subr.mxu0 0.0
          %522 = vmatpush2.msra.mxu0 0.0
          %523 = vmatprep.subr.mxu0 0.0
          %524 = vmatpush2.msra.mxu0 0.0
          %525 = vmatprep.subr.mxu0 0.0
          %526 = vmatpush2.msra.mxu0 0.0
          %527 = vmatprep.subr.mxu0 0.0
          %528 = vmatpush2.msra.mxu0 0.0
          %529 = vmatprep.subr.mxu0 0.0
          %530 = vmatpush2.msra.mxu0 0.0
          %531 = vmatprep.subr.mxu0 0.0
          %532 = vmatpush2.msra.mxu0 0.0
          %533 = vmatprep.subr.mxu0 0.0
          %534 = vmatpush2.msra.mxu0 0.0
          %535 = vmatprep.subr.mxu0 0.0
          %536 = vmatpush2.msra.mxu0 0.0
          %537 = vmatprep.mubr.f32.mxu0 0.0
          %538 = vmatmul.mubr.f32.gmra.mxu0 %v462
          %v539 = vpop.f32.mrf.mxu0
          %v540 = vadd.f32 %v458, %v539
          %v541 = vpop.f32.mrf.mxu0
          %542 = vmatprep.mubr.f32.mxu0 0.0
          %543 = vmatmul.mubr.f32.gmra.mxu0 %v465
          %v544 = vpop.f32.mrf.mxu0
          %v545 = vadd.f32 %v458, %v544
          %v546 = vpop.f32.mrf.mxu0
          %547 = vmatprep.mubr.f32.mxu0 0.0
          %548 = vmatmul.mubr.f32.gmra.mxu0 %v468
          %v549 = vpop.f32.mrf.mxu0
          %v550 = vadd.f32 %v458, %v549
          %v551 = vpop.f32.mrf.mxu0
          %552 = vmatprep.mubr.f32.mxu0 0.0
          %553 = vmatmul.mubr.f32.gmra.mxu0 %v471
          %v554 = vpop.f32.mrf.mxu0
          %v555 = vadd.f32 %v458, %v554
          %v556 = vpop.f32.mrf.mxu0
          %557 = vdwg.mxu0
          %558 = vst [vmem:[#allocation4] sm:$0xff] %v540
          %559 = vst [vmem:[#allocation4 + $0x8] sm:$0xff] %v545
          %560 = vst [vmem:[#allocation4 + $0x10] sm:$0xff] %v550
          %561 = vst [vmem:[#allocation4 + $0x18] sm:$0xff] %v555
          %v562 = vld [vmem:[%s403] sm:$0xff]
          %v563 = vld [vmem:[%s6] sm:$0xff]
          %v564 = vld [vmem:[%s6 + $0x8] sm:$0xff]
          %v565 = vld [vmem:[%s6 + $0x10] sm:$0xff]
          %v566 = vld [vmem:[%s6 + $0x18] sm:$0xff]
          %v567 = vld [vmem:[#allocation2] sm:$0xff]
          %v568 = vld [vmem:[#allocation3] sm:$0xff]
          %v569 = vld [vmem:[#allocation4] sm:$0xff]
          %vm570 = vcmask 261120
          %v572 = vsel %vm570, %v567, 0
          %574 = vmatprep.subr.mxu0 0.0
          %575 = vmatpush1.msra.mxu0 0.0
          %576 = vmatprep.subr.mxu0 0.0
          %577 = vmatpush1.msra.mxu0 0.0
          %578 = vmatprep.subr.mxu0 0.0
          %579 = vmatpush1.msra.mxu0 0.0
          %580 = vmatprep.subr.mxu0 0.0
          %581 = vmatpush1.msra.mxu0 0.0
          %582 = vmatprep.subr.mxu0 0.0
          %583 = vmatpush1.msra.mxu0 0.0
          %584 = vmatprep.subr.mxu0 0.0
          %585 = vmatpush1.msra.mxu0 0.0
          %586 = vmatprep.subr.mxu0 0.0
          %587 = vmatpush1.msra.mxu0 0.0
          %588 = vmatprep.subr.mxu0 0.0
          %589 = vmatpush1.msra.mxu0 0.0
          %590 = vmatprep.subr.mxu0 0.0
          %591 = vmatpush1.msra.mxu0 0.0
          %592 = vmatprep.subr.mxu0 0.0
          %593 = vmatpush1.msra.mxu0 0.0
          %594 = vmatprep.subr.mxu0 0.0
          %595 = vmatpush1.msra.mxu0 0.0
          %596 = vmatprep.subr.mxu0 0.0
          %597 = vmatpush1.msra.mxu0 0.0
          %598 = vmatprep.subr.mxu0 0.0
          %599 = vmatpush1.msra.mxu0 %v566
          %600 = vmatprep.subr.mxu0 0.0
          %601 = vmatpush1.msra.mxu0 %v565
          %602 = vmatprep.subr.mxu0 0.0
          %603 = vmatpush1.msra.mxu0 %v564
          %604 = vmatprep.subr.mxu0 0.0
          %605 = vmatpush1.msra.mxu0 %v563
          %606 = vmatprep.subr.mxu0 0.0
          %607 = vmatpush2.msra.mxu0 0.0
          %608 = vmatprep.subr.mxu0 0.0
          %609 = vmatpush2.msra.mxu0 0.0
          %610 = vmatprep.subr.mxu0 0.0
          %611 = vmatpush2.msra.mxu0 0.0
          %612 = vmatprep.subr.mxu0 0.0
          %613 = vmatpush2.msra.mxu0 0.0
          %614 = vmatprep.subr.mxu0 0.0
          %615 = vmatpush2.msra.mxu0 0.0
          %616 = vmatprep.subr.mxu0 0.0
          %617 = vmatpush2.msra.mxu0 0.0
          %618 = vmatprep.subr.mxu0 0.0
          %619 = vmatpush2.msra.mxu0 0.0
          %620 = vmatprep.subr.mxu0 0.0
          %621 = vmatpush2.msra.mxu0 0.0
          %622 = vmatprep.subr.mxu0 0.0
          %623 = vmatpush2.msra.mxu0 0.0
          %624 = vmatprep.subr.mxu0 0.0
          %625 = vmatpush2.msra.mxu0 0.0
          %626 = vmatprep.subr.mxu0 0.0
          %627 = vmatpush2.msra.mxu0 0.0
          %628 = vmatprep.subr.mxu0 0.0
          %629 = vmatpush2.msra.mxu0 0.0
          %630 = vmatprep.subr.mxu0 0.0
          %631 = vmatpush2.msra.mxu0 0.0
          %632 = vmatprep.subr.mxu0 0.0
          %633 = vmatpush2.msra.mxu0 0.0
          %634 = vmatprep.subr.mxu0 0.0
          %635 = vmatpush2.msra.mxu0 0.0
          %636 = vmatprep.subr.mxu0 0.0
          %637 = vmatpush2.msra.mxu0 0.0
          %638 = vmatprep.mubr.f32.mxu0 0.0
          %639 = vmatmul.mubr.f32.gmra.mxu0 %v572
          %v640 = vpop.f32.mrf.mxu0
          %v641 = vadd.f32 0.0, %v640
          %v642 = vpop.f32.mrf.mxu0
          %643 = vdwg.mxu0
          %v644 = vadd.f32 %v569, %v641
          %v645 = vxor.u32 %v644, 2147483648
          %v646 = vmul.f32 %v645, 1.442695
          %v647 = vpow.pop %v646
          %v648 = vadd.f32 %v647, 1.0
          %v649 = vrcp.pop %v648
          %v650 = vmul.f32 1.0, %v649
          %v651 = vtanh.pop %v644
          %653 = vrot.lane.b32.xlu0 %v568, 32
          %v654 = vpop.permute.xlu0 %653
          %v656 = vmul.f32 %v650, %v654
          %658 = vrot.lane.b32.xlu0 %v651, 64
          %v659 = vpop.permute.xlu0 %658
          %v661 = vmul.f32 %v650, %v659
          %663 = vrot.lane.b32.xlu0 %v661, 32
          %v664 = vpop.permute.xlu0 %663
          %v666 = vadd.f32 %v656, %v664
          %v667 = vtanh.pop %v666
          %669 = vrot.lane.b32.xlu0 %v667, 64
          %v670 = vpop.permute.xlu0 %669
          %v672 = vmul.f32 %v650, %v670
          %v673 = vstv %s432
          %vm674 = vcmp.lt.s32.totalorder %v673, %v562
          %v675 = vsel %vm674, 1, 0
          %676 = vset.pattern.permute.xlu0 0
          %677 = vperm.xlu0 %676, %v675
          %v678 = vpop.permute.xlu0 %677
          %vm679 = vcmp.eq.s32.totalorder %v678, 1
          %v680 = vsel %vm679, %v672, 0.0
          %682 = vrot.lane.b32.xlu0 %v680, 32
          %v683 = vpop.permute.xlu0 %682
          %685 = vst.msk [vmem:[%s428] sm:$0xff] %vm570, %v683
          %686 = vrot.lane.b32.xlu0 %v567, 96
          %v687 = vpop.permute.xlu0 %686
          %v689 = vsel %vm679, %v672, %v687
          %v690 = vsel %vm679, %v666, %v654
          %s691 = scalar_lea.vmem [#allocation4], 8
          %v692 = vld [vmem:[%s691] sm:$0xff]
          %694 = vrot.lane.b32.xlu0 %v689, 32
          %v695 = vpop.permute.xlu0 %694
          %v696 = vsel %vm570, %v695, 0
          %698 = vmatprep.subr.mxu0 0.0
          %699 = vmatpush1.msra.mxu0 0.0
          %700 = vmatprep.subr.mxu0 0.0
          %701 = vmatpush1.msra.mxu0 0.0
          %702 = vmatprep.subr.mxu0 0.0
          %703 = vmatpush1.msra.mxu0 0.0
          %704 = vmatprep.subr.mxu0 0.0
          %705 = vmatpush1.msra.mxu0 0.0
          %706 = vmatprep.subr.mxu0 0.0
          %707 = vmatpush1.msra.mxu0 0.0
          %708 = vmatprep.subr.mxu0 0.0
          %709 = vmatpush1.msra.mxu0 0.0
          %710 = vmatprep.subr.mxu0 0.0
          %711 = vmatpush1.msra.mxu0 0.0
          %712 = vmatprep.subr.mxu0 0.0
          %713 = vmatpush1.msra.mxu0 0.0
          %714 = vmatprep.subr.mxu0 0.0
          %715 = vmatpush1.msra.mxu0 0.0
          %716 = vmatprep.subr.mxu0 0.0
          %717 = vmatpush1.msra.mxu0 0.0
          %718 = vmatprep.subr.mxu0 0.0
          %719 = vmatpush1.msra.mxu0 0.0
          %720 = vmatprep.subr.mxu0 0.0
          %721 = vmatpush1.msra.mxu0 0.0
          %722 = vmatprep.subr.mxu0 0.0
          %723 = vmatpush1.msra.mxu0 %v566
          %724 = vmatprep.subr.mxu0 0.0
          %725 = vmatpush1.msra.mxu0 %v565
          %726 = vmatprep.subr.mxu0 0.0
          %727 = vmatpush1.msra.mxu0 %v564
          %728 = vmatprep.subr.mxu0 0.0
          %729 = vmatpush1.msra.mxu0 %v563
          %730 = vmatprep.subr.mxu0 0.0
          %731 = vmatpush2.msra.mxu0 0.0
          %732 = vmatprep.subr.mxu0 0.0
          %733 = vmatpush2.msra.mxu0 0.0
          %734 = vmatprep.subr.mxu0 0.0
          %735 = vmatpush2.msra.mxu0 0.0
          %736 = vmatprep.subr.mxu0 0.0
          %737 = vmatpush2.msra.mxu0 0.0
          %738 = vmatprep.subr.mxu0 0.0
          %739 = vmatpush2.msra.mxu0 0.0
          %740 = vmatprep.subr.mxu0 0.0
          %741 = vmatpush2.msra.mxu0 0.0
          %742 = vmatprep.subr.mxu0 0.0
          %743 = vmatpush2.msra.mxu0 0.0
          %744 = vmatprep.subr.mxu0 0.0
          %745 = vmatpush2.msra.mxu0 0.0
          %746 = vmatprep.subr.mxu0 0.0
          %747 = vmatpush2.msra.mxu0 0.0
          %748 = vmatprep.subr.mxu0 0.0
          %749 = vmatpush2.msra.mxu0 0.0
          %750 = vmatprep.subr.mxu0 0.0
          %751 = vmatpush2.msra.mxu0 0.0
          %752 = vmatprep.subr.mxu0 0.0
          %753 = vmatpush2.msra.mxu0 0.0
          %754 = vmatprep.subr.mxu0 0.0
          %755 = vmatpush2.msra.mxu0 0.0
          %756 = vmatprep.subr.mxu0 0.0
          %757 = vmatpush2.msra.mxu0 0.0
          %758 = vmatprep.subr.mxu0 0.0
          %759 = vmatpush2.msra.mxu0 0.0
          %760 = vmatprep.subr.mxu0 0.0
          %761 = vmatpush2.msra.mxu0 0.0
          %762 = vmatprep.mubr.f32.mxu0 0.0
          %763 = vmatmul.mubr.f32.gmra.mxu0 %v696
          %v764 = vpop.f32.mrf.mxu0
          %v765 = vadd.f32 0.0, %v764
          %v766 = vpop.f32.mrf.mxu0
          %767 = vdwg.mxu0
          %v768 = vadd.f32 %v692, %v765
          %v769 = vxor.u32 %v768, 2147483648
          %v770 = vmul.f32 %v769, 1.442695
          %v771 = vpow.pop %v770
          %v772 = vadd.f32 %v771, 1.0
          %v773 = vrcp.pop %v772
          %v774 = vmul.f32 1.0, %v773
          %v775 = vtanh.pop %v768
          %v776 = vmul.f32 %v774, %v690
          %778 = vrot.lane.b32.xlu0 %v775, 64
          %v779 = vpop.permute.xlu0 %778
          %v781 = vmul.f32 %v774, %v779
          %783 = vrot.lane.b32.xlu0 %v781, 32
          %v784 = vpop.permute.xlu0 %783
          %v786 = vadd.f32 %v776, %v784
          %v787 = vtanh.pop %v786
          %789 = vrot.lane.b32.xlu0 %v787, 64
          %v790 = vpop.permute.xlu0 %789
          %v792 = vmul.f32 %v774, %v790
          %s793 = sadd.s32 %s432, 1
          %v794 = vstv %s793
          %vm795 = vcmp.lt.s32.totalorder %v794, %v562
          %v796 = vsel %vm795, 1, 0
          %797 = vset.pattern.permute.xlu0 0
          %798 = vperm.xlu0 %797, %v796
          %v799 = vpop.permute.xlu0 %798
          %vm800 = vcmp.eq.s32.totalorder %v799, 1
          %v801 = vsel %vm800, %v792, 0.0
          %803 = vrot.lane.b32.xlu0 %v801, 32
          %v804 = vpop.permute.xlu0 %803
          %s806 = scalar_lea.vmem %s428, 8
          %807 = vst.msk [vmem:[%s806] sm:$0xff] %vm570, %v804
          %v808 = vsel %vm800, %v792, %v689
          %v809 = vsel %vm800, %v786, %v690
          %s810 = scalar_lea.vmem [#allocation4], 16
          %v811 = vld [vmem:[%s810] sm:$0xff]
          %813 = vrot.lane.b32.xlu0 %v808, 32
          %v814 = vpop.permute.xlu0 %813
          %v815 = vsel %vm570, %v814, 0
          %817 = vmatprep.subr.mxu0 0.0
          %818 = vmatpush1.msra.mxu0 0.0
          %819 = vmatprep.subr.mxu0 0.0
          %820 = vmatpush1.msra.mxu0 0.0
          %821 = vmatprep.subr.mxu0 0.0
          %822 = vmatpush1.msra.mxu0 0.0
          %823 = vmatprep.subr.mxu0 0.0
          %824 = vmatpush1.msra.mxu0 0.0
          %825 = vmatprep.subr.mxu0 0.0
          %826 = vmatpush1.msra.mxu0 0.0
          %827 = vmatprep.subr.mxu0 0.0
          %828 = vmatpush1.msra.mxu0 0.0
          %829 = vmatprep.subr.mxu0 0.0
          %830 = vmatpush1.msra.mxu0 0.0
          %831 = vmatprep.subr.mxu0 0.0
          %832 = vmatpush1.msra.mxu0 0.0
          %833 = vmatprep.subr.mxu0 0.0
          %834 = vmatpush1.msra.mxu0 0.0
          %835 = vmatprep.subr.mxu0 0.0
          %836 = vmatpush1.msra.mxu0 0.0
          %837 = vmatprep.subr.mxu0 0.0
          %838 = vmatpush1.msra.mxu0 0.0
          %839 = vmatprep.subr.mxu0 0.0
          %840 = vmatpush1.msra.mxu0 0.0
          %841 = vmatprep.subr.mxu0 0.0
          %842 = vmatpush1.msra.mxu0 %v566
          %843 = vmatprep.subr.mxu0 0.0
          %844 = vmatpush1.msra.mxu0 %v565
          %845 = vmatprep.subr.mxu0 0.0
          %846 = vmatpush1.msra.mxu0 %v564
          %847 = vmatprep.subr.mxu0 0.0
          %848 = vmatpush1.msra.mxu0 %v563
          %849 = vmatprep.subr.mxu0 0.0
          %850 = vmatpush2.msra.mxu0 0.0
          %851 = vmatprep.subr.mxu0 0.0
          %852 = vmatpush2.msra.mxu0 0.0
          %853 = vmatprep.subr.mxu0 0.0
          %854 = vmatpush2.msra.mxu0 0.0
          %855 = vmatprep.subr.mxu0 0.0
          %856 = vmatpush2.msra.mxu0 0.0
          %857 = vmatprep.subr.mxu0 0.0
          %858 = vmatpush2.msra.mxu0 0.0
          %859 = vmatprep.subr.mxu0 0.0
          %860 = vmatpush2.msra.mxu0 0.0
          %861 = vmatprep.subr.mxu0 0.0
          %862 = vmatpush2.msra.mxu0 0.0
          %863 = vmatprep.subr.mxu0 0.0
          %864 = vmatpush2.msra.mxu0 0.0
          %865 = vmatprep.subr.mxu0 0.0
          %866 = vmatpush2.msra.mxu0 0.0
          %867 = vmatprep.subr.mxu0 0.0
          %868 = vmatpush2.msra.mxu0 0.0
          %869 = vmatprep.subr.mxu0 0.0
          %870 = vmatpush2.msra.mxu0 0.0
          %871 = vmatprep.subr.mxu0 0.0
          %872 = vmatpush2.msra.mxu0 0.0
          %873 = vmatprep.subr.mxu0 0.0
          %874 = vmatpush2.msra.mxu0 0.0
          %875 = vmatprep.subr.mxu0 0.0
          %876 = vmatpush2.msra.mxu0 0.0
          %877 = vmatprep.subr.mxu0 0.0
          %878 = vmatpush2.msra.mxu0 0.0
          %879 = vmatprep.subr.mxu0 0.0
          %880 = vmatpush2.msra.mxu0 0.0
          %881 = vmatprep.mubr.f32.mxu0 0.0
          %882 = vmatmul.mubr.f32.gmra.mxu0 %v815
          %v883 = vpop.f32.mrf.mxu0
          %v884 = vadd.f32 0.0, %v883
          %v885 = vpop.f32.mrf.mxu0
          %886 = vdwg.mxu0
          %v887 = vadd.f32 %v811, %v884
          %v888 = vxor.u32 %v887, 2147483648
          %v889 = vmul.f32 %v888, 1.442695
          %v890 = vpow.pop %v889
          %v891 = vadd.f32 %v890, 1.0
          %v892 = vrcp.pop %v891
          %v893 = vmul.f32 1.0, %v892
          %v894 = vtanh.pop %v887
          %v895 = vmul.f32 %v893, %v809
          %897 = vrot.lane.b32.xlu0 %v894, 64
          %v898 = vpop.permute.xlu0 %897
          %v900 = vmul.f32 %v893, %v898
          %902 = vrot.lane.b32.xlu0 %v900, 32
          %v903 = vpop.permute.xlu0 %902
          %v905 = vadd.f32 %v895, %v903
          %v906 = vtanh.pop %v905
          %908 = vrot.lane.b32.xlu0 %v906, 64
          %v909 = vpop.permute.xlu0 %908
          %v911 = vmul.f32 %v893, %v909
          %s912 = sadd.s32 %s432, 2
          %v913 = vstv %s912
          %vm914 = vcmp.lt.s32.totalorder %v913, %v562
          %v915 = vsel %vm914, 1, 0
          %916 = vset.pattern.permute.xlu0 0
          %917 = vperm.xlu0 %916, %v915
          %v918 = vpop.permute.xlu0 %917
          %vm919 = vcmp.eq.s32.totalorder %v918, 1
          %v920 = vsel %vm919, %v911, 0.0
          %922 = vrot.lane.b32.xlu0 %v920, 32
          %v923 = vpop.permute.xlu0 %922
          %s925 = scalar_lea.vmem %s428, 16
          %926 = vst.msk [vmem:[%s925] sm:$0xff] %vm570, %v923
          %v927 = vsel %vm919, %v911, %v808
          %v928 = vsel %vm919, %v905, %v809
          %s929 = scalar_lea.vmem [#allocation4], 24
          %v930 = vld [vmem:[%s929] sm:$0xff]
          %932 = vrot.lane.b32.xlu0 %v927, 32
          %v933 = vpop.permute.xlu0 %932
          %v934 = vsel %vm570, %v933, 0
          %936 = vmatprep.subr.mxu0 0.0
          %937 = vmatpush1.msra.mxu0 0.0
          %938 = vmatprep.subr.mxu0 0.0
          %939 = vmatpush1.msra.mxu0 0.0
          %940 = vmatprep.subr.mxu0 0.0
          %941 = vmatpush1.msra.mxu0 0.0
          %942 = vmatprep.subr.mxu0 0.0
          %943 = vmatpush1.msra.mxu0 0.0
          %944 = vmatprep.subr.mxu0 0.0
          %945 = vmatpush1.msra.mxu0 0.0
          %946 = vmatprep.subr.mxu0 0.0
          %947 = vmatpush1.msra.mxu0 0.0
          %948 = vmatprep.subr.mxu0 0.0
          %949 = vmatpush1.msra.mxu0 0.0
          %950 = vmatprep.subr.mxu0 0.0
          %951 = vmatpush1.msra.mxu0 0.0
          %952 = vmatprep.subr.mxu0 0.0
          %953 = vmatpush1.msra.mxu0 0.0
          %954 = vmatprep.subr.mxu0 0.0
          %955 = vmatpush1.msra.mxu0 0.0
          %956 = vmatprep.subr.mxu0 0.0
          %957 = vmatpush1.msra.mxu0 0.0
          %958 = vmatprep.subr.mxu0 0.0
          %959 = vmatpush1.msra.mxu0 0.0
          %960 = vmatprep.subr.mxu0 0.0
          %961 = vmatpush1.msra.mxu0 %v566
          %962 = vmatprep.subr.mxu0 0.0
          %963 = vmatpush1.msra.mxu0 %v565
          %964 = vmatprep.subr.mxu0 0.0
          %965 = vmatpush1.msra.mxu0 %v564
          %966 = vmatprep.subr.mxu0 0.0
          %967 = vmatpush1.msra.mxu0 %v563
          %968 = vmatprep.subr.mxu0 0.0
          %969 = vmatpush2.msra.mxu0 0.0
          %970 = vmatprep.subr.mxu0 0.0
          %971 = vmatpush2.msra.mxu0 0.0
          %972 = vmatprep.subr.mxu0 0.0
          %973 = vmatpush2.msra.mxu0 0.0
          %974 = vmatprep.subr.mxu0 0.0
          %975 = vmatpush2.msra.mxu0 0.0
          %976 = vmatprep.subr.mxu0 0.0
          %977 = vmatpush2.msra.mxu0 0.0
          %978 = vmatprep.subr.mxu0 0.0
          %979 = vmatpush2.msra.mxu0 0.0
          %980 = vmatprep.subr.mxu0 0.0
          %981 = vmatpush2.msra.mxu0 0.0
          %982 = vmatprep.subr.mxu0 0.0
          %983 = vmatpush2.msra.mxu0 0.0
          %984 = vmatprep.subr.mxu0 0.0
          %985 = vmatpush2.msra.mxu0 0.0
          %986 = vmatprep.subr.mxu0 0.0
          %987 = vmatpush2.msra.mxu0 0.0
          %988 = vmatprep.subr.mxu0 0.0
          %989 = vmatpush2.msra.mxu0 0.0
          %990 = vmatprep.subr.mxu0 0.0
          %991 = vmatpush2.msra.mxu0 0.0
          %992 = vmatprep.subr.mxu0 0.0
          %993 = vmatpush2.msra.mxu0 0.0
          %994 = vmatprep.subr.mxu0 0.0
          %995 = vmatpush2.msra.mxu0 0.0
          %996 = vmatprep.subr.mxu0 0.0
          %997 = vmatpush2.msra.mxu0 0.0
          %998 = vmatprep.subr.mxu0 0.0
          %999 = vmatpush2.msra.mxu0 0.0
          %1000 = vmatprep.mubr.f32.mxu0 0.0
          %1001 = vmatmul.mubr.f32.gmra.mxu0 %v934
          %v1002 = vpop.f32.mrf.mxu0
          %v1003 = vadd.f32 0.0, %v1002
          %v1004 = vpop.f32.mrf.mxu0
          %1005 = vdwg.mxu0
          %v1006 = vadd.f32 %v930, %v1003
          %v1007 = vxor.u32 %v1006, 2147483648
          %v1008 = vmul.f32 %v1007, 1.442695
          %v1009 = vpow.pop %v1008
          %v1010 = vadd.f32 %v1009, 1.0
          %v1011 = vrcp.pop %v1010
          %v1012 = vmul.f32 1.0, %v1011
          %v1013 = vtanh.pop %v1006
          %v1014 = vmul.f32 %v1012, %v928
          %1016 = vrot.lane.b32.xlu0 %v1013, 64
          %v1017 = vpop.permute.xlu0 %1016
          %v1019 = vmul.f32 %v1012, %v1017
          %1021 = vrot.lane.b32.xlu0 %v1019, 32
          %v1022 = vpop.permute.xlu0 %1021
          %v1024 = vadd.f32 %v1014, %v1022
          %v1025 = vtanh.pop %v1024
          %1027 = vrot.lane.b32.xlu0 %v1025, 64
          %v1028 = vpop.permute.xlu0 %1027
          %v1030 = vmul.f32 %v1012, %v1028
          %s1031 = sadd.s32 %s432, 3
          %v1032 = vstv %s1031
          %vm1033 = vcmp.lt.s32.totalorder %v1032, %v562
          %v1034 = vsel %vm1033, 1, 0
          %1035 = vset.pattern.permute.xlu0 0
          %1036 = vperm.xlu0 %1035, %v1034
          %v1037 = vpop.permute.xlu0 %1036
          %vm1038 = vcmp.eq.s32.totalorder %v1037, 1
          %v1039 = vsel %vm1038, %v1030, 0.0
          %1041 = vrot.lane.b32.xlu0 %v1039, 32
          %v1042 = vpop.permute.xlu0 %1041
          %s1044 = scalar_lea.vmem %s428, 24
          %1045 = vst.msk [vmem:[%s1044] sm:$0xff] %vm570, %v1042
          %v1046 = vsel %vm1038, %v1030, %v927
          %v1047 = vsel %vm1038, %v1024, %v928
          %1049 = vrot.lane.b32.xlu0 %v1046, 32
          %v1050 = vpop.permute.xlu0 %1049
          %1052 = vst.msk [vmem:[#allocation2] sm:$0xff] %vm570, %v1050
          %1054 = vrot.lane.b32.xlu0 %v1047, 96
          %v1055 = vpop.permute.xlu0 %1054
          %1057 = vst.msk [vmem:[#allocation3] sm:$0xff] %vm570, %v1055
        $region56: #{_encoder_padded.1} parent=47 // pred_fallthru
          _
        %s1058 = sld [smem:[#allocation6]]
        %p1059 = scmp.ge.s32.totalorder %s432, %s1058
        // Predicated region
        $region57: #{_encoder_padded.1} parent=47 // pred_check
          %p1060 = pneg %p1059
        $region58: #{_encoder_padded.1} parent=47 // pred_check_branch
          %1062 = sbr.rel (%p1060) target = $region60
        $region59: #{_encoder_padded.1} parent=47 // pred_region
          %vm1063 = vcmask 261120
          %1064 = vst.msk [vmem:[%s428] sm:$0xff] %vm1063, 0.0
          %1065 = vst.msk [vmem:[%s428 + $0x8] sm:$0xff] %vm1063, 0.0
          %1066 = vst.msk [vmem:[%s428 + $0x10] sm:$0xff] %vm1063, 0.0
          %1067 = vst.msk [vmem:[%s428 + $0x18] sm:$0xff] %vm1063, 0.0
        $region60: #{_encoder_padded.1} parent=47 // pred_fallthru
          _
        %p1068 = scmp.eq.s32.totalorder %s30, 1
        // Predicated region
        $region61: #{_encoder_padded.1} parent=47 // pred_check
          %p1069 = pneg %p1068
        $region62: #{_encoder_padded.1} parent=47 // pred_check_branch
          %1071 = sbr.rel (%p1069) target = $region64
        $region63: #{_encoder_padded.1} parent=47 // pred_region
          %v1072 = vld [vmem:[#allocation2] sm:$0xff]
          %vm1073 = vcmask 261120
          %1074 = vst.msk [vmem:[#allocation7] sm:$0xff] %vm1073, %v1072
          %v1075 = vld [vmem:[#allocation3] sm:$0xff]
          %1076 = vst.msk [vmem:[#allocation9] sm:$0xff] %vm1073, %v1075
        $region64: #{_encoder_padded.1} parent=47 // pred_fallthru
          _
        %s1077 = smul.u32 %s29, 2
        %s1078 = sadd.s32 %s1077, %s30
        %s1079 = smul.u32 4, %s1078
        %p1080 = scmp.lt.s32.totalorder %s1079, 7
        %s1081 = scalar_select %p1080, %s1079, 7
        %s1082 = smul.addr %s1081, 8
        %s1083 = scalar_lea.vmem %s8, %s1082
        // Predicated region
        $region65: #{_encoder_padded.1} parent=47 // pred_check
          %p1084 = pneg %p230
        $region66: #{_encoder_padded.1} parent=47 // pred_check_branch
          %1086 = sbr.rel (%p1084) target = $region68
        $region67: #{_encoder_padded.1} parent=47 // pred_region
          %s1087 = smul.u32 %s29, 2
          %s1088 = sadd.s32 %s1087, %s30
          %s1089 = smul.u32 4, %s1088
        $region68: #{_encoder_padded.1} parent=47 // pred_fallthru
          _
        // Predicated region
        $region69: #{_encoder_padded.1} parent=47 // pred_check
          %p1090 = pneg %p256
        $region70: #{_encoder_padded.1} parent=47 // pred_check_branch
          %1092 = sbr.rel (%p1090) target = $region72
        $region71: #{_encoder_padded.1} parent=47 // pred_region
          %s1094 = ssub.s32 128, 128
          %1095 = vsyncadd [#allocation8], %s1094
          %s1096 = smul.addr %s29, 128
          %s1097 = scalar_lea.hbm %s9, %s1096
          %s1099 = sshll.u32 [#allocation7], 4
          %s1100 = int_to_ptr.vmem [resolvable:$true] %s1099
          %1102 = dma.vmem_to_hbm [thread:$0]  %s1100, 128, %s1097, [#allocation8]
        $region72: #{_encoder_padded.1} parent=47 // pred_fallthru
          _
        // Predicated region
        $region73: #{_encoder_padded.1} parent=47 // pred_check
          %p1103 = pneg %p282
        $region74: #{_encoder_padded.1} parent=47 // pred_check_branch
          %1105 = sbr.rel (%p1103) target = $region76
        $region75: #{_encoder_padded.1} parent=47 // pred_region
          %s1107 = ssub.s32 128, 128
          %1108 = vsyncadd [#allocation10], %s1107
          %s1109 = smul.addr %s29, 128
          %s1110 = scalar_lea.hbm %s10, %s1109
          %s1112 = sshll.u32 [#allocation9], 4
          %s1113 = int_to_ptr.vmem [resolvable:$true] %s1112
          %1115 = dma.vmem_to_hbm [thread:$0]  %s1113, 128, %s1110, [#allocation10]
        $region76: #{_encoder_padded.1} parent=47 // pred_fallthru
          _
        // Predicated region
        $region77: #{_encoder_padded.1} parent=47 // pred_check
          %p1116 = pneg %p256
        $region78: #{_encoder_padded.1} parent=47 // pred_check_branch
          %1118 = sbr.rel (%p1116) target = $region80
        $region79: #{_encoder_padded.1} parent=47 // pred_region
          %1119 = dma.done [#allocation8], 128
        $region80: #{_encoder_padded.1} parent=47 // pred_fallthru
          _
        // Predicated region
        $region81: #{_encoder_padded.1} parent=47 // pred_check
          %p1120 = pneg %p282
        $region82: #{_encoder_padded.1} parent=47 // pred_check_branch
          %1122 = sbr.rel (%p1120) target = $region84
        $region83: #{_encoder_padded.1} parent=47 // pred_region
          %1123 = dma.done [#allocation10], 128
        $region84: #{_encoder_padded.1} parent=47 // pred_fallthru
          _
      $region48: #{_encoder_padded.1} parent=5 // pred_fallthru
        _
      %p1124 = scmp.le.s32.totalorder 2, %s20
      // Predicated region
      $region85: #{_encoder_padded.1} parent=5 // pred_check
        %p1125 = pneg %p1124
      $region86: #{_encoder_padded.1} parent=5 // pred_check_branch
        %1127 = sbr.rel (%p1125) target = $region88
      $region87: #{_encoder_padded.1} parent=5 // pred_region
        %s1128 = ssub.s32 %s20, 2
        // Predicated region
        $region89: #{_encoder_padded.1} parent=87 // pred_check
          %p1129 = pneg %p236
        $region90: #{_encoder_padded.1} parent=87 // pred_check_branch
          %1131 = sbr.rel (%p1129) target = $region92
        $region91: #{_encoder_padded.1} parent=87 // pred_region
          %s1132 = smul.u32 %s31, 2
          %s1133 = sadd.s32 %s1132, %s32
          %s1134 = smul.u32 4, %s1133
          %p1135 = scmp.lt.s32.totalorder %s1134, 7
          %s1136 = scalar_select %p1135, %s1134, 7
          %s1137 = smul.addr %s1136, 8
          %s1138 = scalar_lea.vmem %s8, %s1137
        $region92: #{_encoder_padded.1} parent=87 // pred_fallthru
          _
      $region88: #{_encoder_padded.1} parent=5 // pred_fallthru
        _
    $region6: #{_encoder_padded.1} parent=1 // loop_footer
      %s24 = sadd.s32 1, %s20
    $region7: #{_encoder_padded.1} parent=1 // loop_footer_branch
      %19 = sbr.rel target = $region3
    $region8: #{_encoder_padded.1} parent=1 // loop_exit
      _
    %1139 = vsyncpa [#allocation8], 1
    %s1140 = scalar_lea.sflag [#allocation8], 1
    %1141 = vsyncpa %s1140, 1
    %1142 = vsyncpa [#allocation10], 1

</llo_original>
